<compile_context>
chip_gen: v6e
topology: v6e:2x2x1
jax: 0.10.0
libtpu: 0.0.40
codegen_flags: <defaults>
</compile_context>

<pallas_src>
import numpy as np
import jax
import jax.numpy as jnp
from jax.experimental import pallas as pl
from jax.experimental.pallas import tpu as pltpu


def _round_up(x, m):
    return (x + m - 1) // m * m


# ----------------------------------------------------------------------------
# Pallas kernel: 2-layer RGCN, entity-destination rows only.
# ----------------------------------------------------------------------------
def _rgcn2_entity_kernel(w_ref, xe_ref, xm_ref,
                         w1r_ref, w1root_ref, b1_ref,
                         w2r_ref, w2root_ref, b2_ref,
                         out_ref):
    """
    w_ref   : (TM, Nm)        entity-mole weight block (edge-bin source)
    xe_ref  : (TM, Cin)       entity feature block
    xm_ref  : (Nm, Cin)       all mole features
    w1r_ref : (R-1, Cin, Co)  layer-1 relation weights (relations 1..levels)
    w2r_ref : (R-1, Co,  Co)  layer-2 relation weights
    out_ref : (TM, Co)        layer-2 entity rows
    """
    f32, bf16 = jnp.float32, jnp.bfloat16
    num_rel = w1r_ref.shape[0]          # populated relations (1..levels)
    big_l = num_rel + 1                 # bin denominator = levels + 1
    tm = w_ref.shape[0]

    def mm(a, b):                       # bf16 MXU matmul, f32 accumulation
        return jnp.dot(a.astype(bf16), b.astype(bf16),
                       preferred_element_type=f32)

    w = w_ref[...]                      # (TM, Nm), f32 (exact bin compare)
    xm_bf = xm_ref[...].astype(bf16)    # (Nm, Cin), cast once, reused twice

    # --- per-relation 0/1 masks + mean-normalization scales -----------------
    # mask_r = (w > r/L) & (w <= (r+1)/L) = gt[r-1] & ~gt[r]
    gt = [w > (r / big_l) for r in range(1, big_l + 1)]
    mask_f, inv_deg = [], []
    for r in range(1, big_l):           # static unroll, small R
        m = jnp.logical_and(gt[r - 1], jnp.logical_not(gt[r])).astype(f32)
        d = jnp.sum(m, axis=1, keepdims=True)
        mask_f.append(m)
        inv_deg.append(1.0 / jnp.maximum(d, 1.0))
    a_v = jnp.concatenate(mask_f, axis=0).astype(bf16)      # ((R-1)*TM, Nm)
    inv_v = jnp.concatenate(inv_deg, axis=0)                 # ((R-1)*TM, 1) f32

    # --- layer 1 -------------------------------------------------------------
    z1 = jnp.dot(a_v, xm_bf, preferred_element_type=f32) * inv_v   # fused agg
    agg1 = mm(z1[0:tm], w1r_ref[0])
    for r in range(1, num_rel):
        agg1 = agg1 + mm(z1[r * tm:(r + 1) * tm], w1r_ref[r])
    h_e = jnp.maximum(agg1 + mm(xe_ref[...], w1root_ref[...]) + b1_ref[...],
                      0.0)                                   # (TM, Co) f32
    # Mole rows have no incoming edges -> root + bias only.  Recomputed per
    # entity tile (cheap relative to the fused aggregation matmul) to keep the
    # grid axis "parallel" for megacore sharding.
    h_m = jnp.maximum(mm(xm_bf, w1root_ref[...]) + b1_ref[...], 0.0)  # (Nm, Co)

    # --- layer 2 (entity rows only; mole rows are discarded by the module) ---
    z2 = jnp.dot(a_v, h_m.astype(bf16), preferred_element_type=f32) * inv_v
    agg2 = mm(z2[0:tm], w2r_ref[0])
    for r in range(1, num_rel):
        agg2 = agg2 + mm(z2[r * tm:(r + 1) * tm], w2r_ref[r])
    out_ref[...] = (agg2 + mm(h_e, w2root_ref[...])
                    + b2_ref[...]).astype(out_ref.dtype)


# ----------------------------------------------------------------------------
# Wrapper: pad to TPU-friendly shapes, tile entity rows, call the kernel.
# ----------------------------------------------------------------------------
def rgcn2_entity_forward(entity_mole_weight, x_entity, x_mole, params,
                         levels=5, tile_m=128):
    big_l = levels + 1                  # number of relations in the module
    num_rel = big_l - 1                 # relations actually populated (1..levels)
    n_e, c_in = x_entity.shape
    n_m = x_mole.shape[0]
    c_out = params["w2_root"].shape[1]

    tm = _round_up(min(tile_m, max(n_e, 8)), 8)
    n_e_p = _round_up(n_e, tm)
    n_m_p = _round_up(n_m, 8)
    c_in_p = _round_up(c_in, 128)       # lane-dense feature dims
    c_out_p = _round_up(c_out, 128)

    def pad(a, shape):
        a = jnp.asarray(a, jnp.float32)
        idx = tuple(slice(0, s) for s in a.shape)
        return jnp.zeros(shape, jnp.float32).at[idx].set(a)

    w_p = pad(entity_mole_weight, (n_e_p, n_m_p))
    xe_p = pad(x_entity, (n_e_p, c_in_p))
    xm_p = pad(x_mole, (n_m_p, c_in_p))
    # relation 0 is never populated by the binning -> drop its weights
    w1r = pad(params["w1_rel"][1:], (num_rel, c_in_p, c_out_p))
    w2r = pad(params["w2_rel"][1:], (num_rel, c_out_p, c_out_p))
    w1root = pad(params["w1_root"], (c_in_p, c_out_p))
    w2root = pad(params["w2_root"], (c_out_p, c_out_p))
    b1 = pad(params["b1"], (1, c_out_p))
    b2 = pad(params["b2"], (1, c_out_p))

    grid = (n_e_p // tm,)
    in_specs = [
        pl.BlockSpec((tm, n_m_p), lambda i: (i, 0)),                 # weights
        pl.BlockSpec((tm, c_in_p), lambda i: (i, 0)),                # entity x
        pl.BlockSpec((n_m_p, c_in_p), lambda i: (0, 0)),             # mole x
        pl.BlockSpec((num_rel, c_in_p, c_out_p), lambda i: (0, 0, 0)),
        pl.BlockSpec((c_in_p, c_out_p), lambda i: (0, 0)),
        pl.BlockSpec((1, c_out_p), lambda i: (0, 0)),
        pl.BlockSpec((num_rel, c_out_p, c_out_p), lambda i: (0, 0, 0)),
        pl.BlockSpec((c_out_p, c_out_p), lambda i: (0, 0)),
        pl.BlockSpec((1, c_out_p), lambda i: (0, 0)),
    ]
    out_specs = pl.BlockSpec((tm, c_out_p), lambda i: (i, 0))

    out = pl.pallas_call(
        _rgcn2_entity_kernel,
        out_shape=jax.ShapeDtypeStruct((n_e_p, c_out_p), jnp.float32),
        grid=grid,
        in_specs=in_specs,
        out_specs=out_specs,
        compiler_params=pltpu.CompilerParams(
            dimension_semantics=("parallel",)),
    )(w_p, xe_p, xm_p, w1r, w1root, b1, w2r, w2root, b2)
    return out[:n_e, :c_out]


def init_params(key, c_in, c_out, num_relations):
    def glorot(k, shape):
        fan_in, fan_out = shape[-2], shape[-1]
        limit = np.sqrt(6.0 / (fan_in + fan_out))
        return jax.random.uniform(k, shape, jnp.float32, -limit, limit)

    ks = jax.random.split(key, 6)
    return {
        "w1_rel": glorot(ks[0], (num_relations, c_in, c_out)),
        "w1_root": glorot(ks[1], (c_in, c_out)),
        "b1": 0.1 * jax.random.normal(ks[2], (1, c_out), jnp.float32),
        "w2_rel": glorot(ks[3], (num_relations, c_out, c_out)),
        "w2_root": glorot(ks[4], (c_out, c_out)),
        "b2": 0.1 * jax.random.normal(ks[5], (1, c_out), jnp.float32),
    }


def hetero_effect_graph_forward(emb_entity, emb_mole, entity_mole_weights,
                                params, levels=5, tile_m=128):
    """JAX/Pallas equivalent of hetero_effect_graph.forward."""
    # TODO(synk): the degenerate all-zero-weight branch of create_hetero_graph
    # (relation-0 edges from mole 0 with out-of-range dst indices in the
    # original code) is not reproduced.
    ent = emb_entity[0]                                   # (N_e, C_in)
    mol = emb_mole[0]                                     # (N_m, C_in)
    out = rgcn2_entity_forward(entity_mole_weights, ent, mol, params,
                               levels=levels, tile_m=tile_m)
    return out[None]                                      # (1, N_e, C_out)


# ----------------------------------------------------------------------------
# Pure numpy reference (full homogeneous-graph formulation, f32).
# ----------------------------------------------------------------------------
def _reference(emb_entity, emb_mole, weights, params, levels=5):
    big_l = levels + 1
    ent = np.asarray(emb_entity[0], np.float32)
    mol = np.asarray(emb_mole[0], np.float32)
    w = np.asarray(weights, np.float32)
    n_e, n_m = w.shape
    n = n_e + n_m
    x = np.concatenate([ent, mol], axis=0)
    adj = np.zeros((big_l, n, n), np.float32)
    for r in range(1, big_l):
        mask = ((w > r / big_l) & (w <= (r + 1) / big_l)).astype(np.float32)
        deg = mask.sum(axis=1, keepdims=True)
        adj[r, :n_e, n_e:] = mask / np.maximum(deg, 1.0)
    p = {k: np.asarray(v, np.float32) for k, v in params.items()}

    def rgcn(x, wrel, wroot, b):
        out = x @ wroot + b
        for r in range(big_l):
            out = out + (adj[r] @ x) @ wrel[r]
        return out

    h = np.maximum(rgcn(x, p["w1_rel"], p["w1_root"], p["b1"]), 0.0)
    o = rgcn(h, p["w2_rel"], p["w2_root"], p["b2"])
    return o[:n_e][None]


if __name__ == "__main__":
    key = jax.random.PRNGKey(0)
    k_ent, k_mol, k_w, k_par = jax.random.split(key, 4)

    n_entity, n_mole = 16, 8
    c_in, c_out = 32, 32
    levels = 5

    emb_entity = jax.random.normal(k_ent, (1, n_entity, c_in), jnp.float32)
    emb_mole = jax.random.normal(k_mol, (1, n_mole, c_in), jnp.float32)
    entity_mole_weights = jax.random.uniform(k_w, (n_entity, n_mole), jnp.float32)

    params = init_params(k_par, c_in, c_out, levels + 1)

    # tile_m=8 -> grid of 2 entity-row tiles (exercises the parallel grid path)
    out = hetero_effect_graph_forward(emb_entity, emb_mole,
                                      entity_mole_weights, params,
                                      levels=levels, tile_m=8)
    out = jax.block_until_ready(out)

    ref = _reference(emb_entity, emb_mole, entity_mole_weights, params, levels)
    assert out.shape == (1, n_entity, c_out), out.shape
    # bf16 MXU operands with f32 accumulation -> slightly looser tolerance
    np.testing.assert_allclose(np.asarray(out), ref, rtol=2e-2, atol=2e-2)

    print("KERNEL_OK")
</pallas_src>

<mosaic_0001>
module attributes {stable_mosaic.version = 11 : i64} {
  func.func @_rgcn2_entity_kernel(%arg0: i32, %arg1: memref<8x8xf32, #tpu.memory_space<vmem>>, %arg2: memref<8x128xf32, #tpu.memory_space<vmem>>, %arg3: memref<8x128xf32, #tpu.memory_space<vmem>>, %arg4: memref<5x128x128xf32, #tpu.memory_space<vmem>>, %arg5: memref<128x128xf32, #tpu.memory_space<vmem>>, %arg6: memref<1x128xf32, #tpu.memory_space<vmem>>, %arg7: memref<5x128x128xf32, #tpu.memory_space<vmem>>, %arg8: memref<128x128xf32, #tpu.memory_space<vmem>>, %arg9: memref<1x128xf32, #tpu.memory_space<vmem>>, %arg10: memref<8x128xf32, #tpu.memory_space<vmem>>) attributes {dimension_semantics = [#tpu.dimension_semantics<parallel>], iteration_bounds = array<i64: 2>, scalar_prefetch = 0 : i64, scratch_operands = 0 : i64, tpu.core_type = #tpu.core_type<tc>, window_params = [{transform_indices = @transform_0, window_bounds = array<i64: 8, 8>}, {transform_indices = @transform_1, window_bounds = array<i64: 8, 128>}, {pipeline_mode = #tpu.pipeline_mode<synchronous>, transform_indices = @transform_2, window_bounds = array<i64: 8, 128>}, {pipeline_mode = #tpu.pipeline_mode<synchronous>, transform_indices = @transform_3, window_bounds = array<i64: 5, 128, 128>}, {pipeline_mode = #tpu.pipeline_mode<synchronous>, transform_indices = @transform_4, window_bounds = array<i64: 128, 128>}, {pipeline_mode = #tpu.pipeline_mode<synchronous>, transform_indices = @transform_5, window_bounds = array<i64: 1, 128>}, {pipeline_mode = #tpu.pipeline_mode<synchronous>, transform_indices = @transform_6, window_bounds = array<i64: 5, 128, 128>}, {pipeline_mode = #tpu.pipeline_mode<synchronous>, transform_indices = @transform_7, window_bounds = array<i64: 128, 128>}, {pipeline_mode = #tpu.pipeline_mode<synchronous>, transform_indices = @transform_8, window_bounds = array<i64: 1, 128>}, {transform_indices = @transform_9, window_bounds = array<i64: 8, 128>}]} {
    %c0 = arith.constant 0 : index
    %c0_0 = arith.constant 0 : index
    %0 = vector.load %arg1[%c0, %c0_0] : memref<8x8xf32, #tpu.memory_space<vmem>>, vector<8x8xf32>
    %c0_1 = arith.constant 0 : index
    %c0_2 = arith.constant 0 : index
    %1 = vector.load %arg3[%c0_1, %c0_2] : memref<8x128xf32, #tpu.memory_space<vmem>>, vector<8x128xf32>
    %2 = arith.truncf %1 : vector<8x128xf32> to vector<8x128xbf16>
    %cst = arith.constant 0.166666672 : f32
    %3 = vector.broadcast %cst : f32 to vector<8x8xf32>
    %4 = arith.cmpf ogt, %0, %3 : vector<8x8xf32>
    %cst_3 = arith.constant 0.333333343 : f32
    %5 = vector.broadcast %cst_3 : f32 to vector<8x8xf32>
    %6 = arith.cmpf ogt, %0, %5 : vector<8x8xf32>
    %cst_4 = arith.constant 5.000000e-01 : f32
    %7 = vector.broadcast %cst_4 : f32 to vector<8x8xf32>
    %8 = arith.cmpf ogt, %0, %7 : vector<8x8xf32>
    %cst_5 = arith.constant 0.666666686 : f32
    %9 = vector.broadcast %cst_5 : f32 to vector<8x8xf32>
    %10 = arith.cmpf ogt, %0, %9 : vector<8x8xf32>
    %cst_6 = arith.constant 0.833333313 : f32
    %11 = vector.broadcast %cst_6 : f32 to vector<8x8xf32>
    %12 = arith.cmpf ogt, %0, %11 : vector<8x8xf32>
    %cst_7 = arith.constant 1.000000e+00 : f32
    %13 = vector.broadcast %cst_7 : f32 to vector<8x8xf32>
    %14 = arith.cmpf ogt, %0, %13 : vector<8x8xf32>
    %cst_8 = arith.constant dense<true> : vector<8x8xi1>
    %15 = arith.xori %6, %cst_8 : vector<8x8xi1>
    %16 = arith.andi %4, %15 : vector<8x8xi1>
    %17 = arith.extui %16 : vector<8x8xi1> to vector<8x8xi32>
    %18 = arith.sitofp %17 : vector<8x8xi32> to vector<8x8xf32>
    %cst_9 = arith.constant dense<0.000000e+00> : vector<8xf32>
    %19 = vector.multi_reduction <add>, %18, %cst_9 [1] : vector<8x8xf32> to vector<8xf32>
    %20 = vector.shape_cast %19 : vector<8xf32> to vector<8x1xf32>
    %cst_10 = arith.constant 1.000000e+00 : f32
    %21 = vector.broadcast %cst_10 : f32 to vector<8x1xf32>
    %22 = arith.maximumf %20, %21 : vector<8x1xf32>
    %cst_11 = arith.constant 1.000000e+00 : f32
    %23 = vector.broadcast %cst_11 : f32 to vector<8x1xf32>
    %24 = arith.divf %23, %22 : vector<8x1xf32>
    %cst_12 = arith.constant dense<true> : vector<8x8xi1>
    %25 = arith.xori %8, %cst_12 : vector<8x8xi1>
    %26 = arith.andi %6, %25 : vector<8x8xi1>
    %27 = arith.extui %26 : vector<8x8xi1> to vector<8x8xi32>
    %28 = arith.sitofp %27 : vector<8x8xi32> to vector<8x8xf32>
    %cst_13 = arith.constant dense<0.000000e+00> : vector<8xf32>
    %29 = vector.multi_reduction <add>, %28, %cst_13 [1] : vector<8x8xf32> to vector<8xf32>
    %30 = vector.shape_cast %29 : vector<8xf32> to vector<8x1xf32>
    %cst_14 = arith.constant 1.000000e+00 : f32
    %31 = vector.broadcast %cst_14 : f32 to vector<8x1xf32>
    %32 = arith.maximumf %30, %31 : vector<8x1xf32>
    %cst_15 = arith.constant 1.000000e+00 : f32
    %33 = vector.broadcast %cst_15 : f32 to vector<8x1xf32>
    %34 = arith.divf %33, %32 : vector<8x1xf32>
    %cst_16 = arith.constant dense<true> : vector<8x8xi1>
    %35 = arith.xori %10, %cst_16 : vector<8x8xi1>
    %36 = arith.andi %8, %35 : vector<8x8xi1>
    %37 = arith.extui %36 : vector<8x8xi1> to vector<8x8xi32>
    %38 = arith.sitofp %37 : vector<8x8xi32> to vector<8x8xf32>
    %cst_17 = arith.constant dense<0.000000e+00> : vector<8xf32>
    %39 = vector.multi_reduction <add>, %38, %cst_17 [1] : vector<8x8xf32> to vector<8xf32>
    %40 = vector.shape_cast %39 : vector<8xf32> to vector<8x1xf32>
    %cst_18 = arith.constant 1.000000e+00 : f32
    %41 = vector.broadcast %cst_18 : f32 to vector<8x1xf32>
    %42 = arith.maximumf %40, %41 : vector<8x1xf32>
    %cst_19 = arith.constant 1.000000e+00 : f32
    %43 = vector.broadcast %cst_19 : f32 to vector<8x1xf32>
    %44 = arith.divf %43, %42 : vector<8x1xf32>
    %cst_20 = arith.constant dense<true> : vector<8x8xi1>
    %45 = arith.xori %12, %cst_20 : vector<8x8xi1>
    %46 = arith.andi %10, %45 : vector<8x8xi1>
    %47 = arith.extui %46 : vector<8x8xi1> to vector<8x8xi32>
    %48 = arith.sitofp %47 : vector<8x8xi32> to vector<8x8xf32>
    %cst_21 = arith.constant dense<0.000000e+00> : vector<8xf32>
    %49 = vector.multi_reduction <add>, %48, %cst_21 [1] : vector<8x8xf32> to vector<8xf32>
    %50 = vector.shape_cast %49 : vector<8xf32> to vector<8x1xf32>
    %cst_22 = arith.constant 1.000000e+00 : f32
    %51 = vector.broadcast %cst_22 : f32 to vector<8x1xf32>
    %52 = arith.maximumf %50, %51 : vector<8x1xf32>
    %cst_23 = arith.constant 1.000000e+00 : f32
    %53 = vector.broadcast %cst_23 : f32 to vector<8x1xf32>
    %54 = arith.divf %53, %52 : vector<8x1xf32>
    %cst_24 = arith.constant dense<true> : vector<8x8xi1>
    %55 = arith.xori %14, %cst_24 : vector<8x8xi1>
    %56 = arith.andi %12, %55 : vector<8x8xi1>
    %57 = arith.extui %56 : vector<8x8xi1> to vector<8x8xi32>
    %58 = arith.sitofp %57 : vector<8x8xi32> to vector<8x8xf32>
    %cst_25 = arith.constant dense<0.000000e+00> : vector<8xf32>
    %59 = vector.multi_reduction <add>, %58, %cst_25 [1] : vector<8x8xf32> to vector<8xf32>
    %60 = vector.shape_cast %59 : vector<8xf32> to vector<8x1xf32>
    %cst_26 = arith.constant 1.000000e+00 : f32
    %61 = vector.broadcast %cst_26 : f32 to vector<8x1xf32>
    %62 = arith.maximumf %60, %61 : vector<8x1xf32>
    %cst_27 = arith.constant 1.000000e+00 : f32
    %63 = vector.broadcast %cst_27 : f32 to vector<8x1xf32>
    %64 = arith.divf %63, %62 : vector<8x1xf32>
    %65 = tpu.concatenate %18, %28, %38, %48, %58 in 0 : vector<8x8xf32>, vector<8x8xf32>, vector<8x8xf32>, vector<8x8xf32>, vector<8x8xf32> -> vector<40x8xf32>
    %66 = arith.truncf %65 : vector<40x8xf32> to vector<40x8xbf16>
    %67 = tpu.concatenate %24, %34, %44, %54, %64 in 0 : vector<8x1xf32>, vector<8x1xf32>, vector<8x1xf32>, vector<8x1xf32>, vector<8x1xf32> -> vector<40x1xf32>
    %cst_28 = arith.constant dense<0.000000e+00> : vector<40x128xf32>
    %68 = tpu.matmul %66, %2, %cst_28 {dimension_numbers = #tpu.dot_dimension_numbers<[1], [0], [0], [1], [0, 0, 1, 1], [], []>} : vector<40x8xbf16>, vector<8x128xbf16>, vector<40x128xf32> -> vector<40x128xf32>
    %69 = vector.broadcast %67 : vector<40x1xf32> to vector<40x128xf32>
    %70 = arith.mulf %68, %69 : vector<40x128xf32>
    %71 = vector.extract_strided_slice %70 {offsets = [0, 0], sizes = [8, 128], strides = [1, 1]} : vector<40x128xf32> to vector<8x128xf32>
    %c0_29 = arith.constant 0 : index
    %c0_30 = arith.constant 0 : index
    %c0_31 = arith.constant 0 : index
    %72 = vector.load %arg4[%c0_29, %c0_30, %c0_31] : memref<5x128x128xf32, #tpu.memory_space<vmem>>, vector<1x128x128xf32>
    %73 = vector.shape_cast %72 : vector<1x128x128xf32> to vector<128x128xf32>
    %74 = arith.truncf %71 : vector<8x128xf32> to vector<8x128xbf16>
    %75 = arith.truncf %73 : vector<128x128xf32> to vector<128x128xbf16>
    %cst_32 = arith.constant dense<0.000000e+00> : vector<8x128xf32>
    %76 = tpu.matmul %74, %75, %cst_32 {dimension_numbers = #tpu.dot_dimension_numbers<[1], [0], [0], [1], [0, 0, 1, 1], [], []>} : vector<8x128xbf16>, vector<128x128xbf16>, vector<8x128xf32> -> vector<8x128xf32>
    %77 = vector.extract_strided_slice %70 {offsets = [8, 0], sizes = [8, 128], strides = [1, 1]} : vector<40x128xf32> to vector<8x128xf32>
    %c1 = arith.constant 1 : index
    %c0_33 = arith.constant 0 : index
    %c0_34 = arith.constant 0 : index
    %78 = vector.load %arg4[%c1, %c0_33, %c0_34] : memref<5x128x128xf32, #tpu.memory_space<vmem>>, vector<1x128x128xf32>
    %79 = vector.shape_cast %78 : vector<1x128x128xf32> to vector<128x128xf32>
    %80 = arith.truncf %77 : vector<8x128xf32> to vector<8x128xbf16>
    %81 = arith.truncf %79 : vector<128x128xf32> to vector<128x128xbf16>
    %cst_35 = arith.constant dense<0.000000e+00> : vector<8x128xf32>
    %82 = tpu.matmul %80, %81, %cst_35 {dimension_numbers = #tpu.dot_dimension_numbers<[1], [0], [0], [1], [0, 0, 1, 1], [], []>} : vector<8x128xbf16>, vector<128x128xbf16>, vector<8x128xf32> -> vector<8x128xf32>
    %83 = arith.addf %76, %82 : vector<8x128xf32>
    %84 = vector.extract_strided_slice %70 {offsets = [16, 0], sizes = [8, 128], strides = [1, 1]} : vector<40x128xf32> to vector<8x128xf32>
    %c2 = arith.constant 2 : index
    %c0_36 = arith.constant 0 : index
    %c0_37 = arith.constant 0 : index
    %85 = vector.load %arg4[%c2, %c0_36, %c0_37] : memref<5x128x128xf32, #tpu.memory_space<vmem>>, vector<1x128x128xf32>
    %86 = vector.shape_cast %85 : vector<1x128x128xf32> to vector<128x128xf32>
    %87 = arith.truncf %84 : vector<8x128xf32> to vector<8x128xbf16>
    %88 = arith.truncf %86 : vector<128x128xf32> to vector<128x128xbf16>
    %cst_38 = arith.constant dense<0.000000e+00> : vector<8x128xf32>
    %89 = tpu.matmul %87, %88, %cst_38 {dimension_numbers = #tpu.dot_dimension_numbers<[1], [0], [0], [1], [0, 0, 1, 1], [], []>} : vector<8x128xbf16>, vector<128x128xbf16>, vector<8x128xf32> -> vector<8x128xf32>
    %90 = arith.addf %83, %89 : vector<8x128xf32>
    %91 = vector.extract_strided_slice %70 {offsets = [24, 0], sizes = [8, 128], strides = [1, 1]} : vector<40x128xf32> to vector<8x128xf32>
    %c3 = arith.constant 3 : index
    %c0_39 = arith.constant 0 : index
    %c0_40 = arith.constant 0 : index
    %92 = vector.load %arg4[%c3, %c0_39, %c0_40] : memref<5x128x128xf32, #tpu.memory_space<vmem>>, vector<1x128x128xf32>
    %93 = vector.shape_cast %92 : vector<1x128x128xf32> to vector<128x128xf32>
    %94 = arith.truncf %91 : vector<8x128xf32> to vector<8x128xbf16>
    %95 = arith.truncf %93 : vector<128x128xf32> to vector<128x128xbf16>
    %cst_41 = arith.constant dense<0.000000e+00> : vector<8x128xf32>
    %96 = tpu.matmul %94, %95, %cst_41 {dimension_numbers = #tpu.dot_dimension_numbers<[1], [0], [0], [1], [0, 0, 1, 1], [], []>} : vector<8x128xbf16>, vector<128x128xbf16>, vector<8x128xf32> -> vector<8x128xf32>
    %97 = arith.addf %90, %96 : vector<8x128xf32>
    %98 = vector.extract_strided_slice %70 {offsets = [32, 0], sizes = [8, 128], strides = [1, 1]} : vector<40x128xf32> to vector<8x128xf32>
    %c4 = arith.constant 4 : index
    %c0_42 = arith.constant 0 : index
    %c0_43 = arith.constant 0 : index
    %99 = vector.load %arg4[%c4, %c0_42, %c0_43] : memref<5x128x128xf32, #tpu.memory_space<vmem>>, vector<1x128x128xf32>
    %100 = vector.shape_cast %99 : vector<1x128x128xf32> to vector<128x128xf32>
    %101 = arith.truncf %98 : vector<8x128xf32> to vector<8x128xbf16>
    %102 = arith.truncf %100 : vector<128x128xf32> to vector<128x128xbf16>
    %cst_44 = arith.constant dense<0.000000e+00> : vector<8x128xf32>
    %103 = tpu.matmul %101, %102, %cst_44 {dimension_numbers = #tpu.dot_dimension_numbers<[1], [0], [0], [1], [0, 0, 1, 1], [], []>} : vector<8x128xbf16>, vector<128x128xbf16>, vector<8x128xf32> -> vector<8x128xf32>
    %104 = arith.addf %97, %103 : vector<8x128xf32>
    %c0_45 = arith.constant 0 : index
    %c0_46 = arith.constant 0 : index
    %105 = vector.load %arg2[%c0_45, %c0_46] : memref<8x128xf32, #tpu.memory_space<vmem>>, vector<8x128xf32>
    %c0_47 = arith.constant 0 : index
    %c0_48 = arith.constant 0 : index
    %106 = vector.load %arg5[%c0_47, %c0_48] : memref<128x128xf32, #tpu.memory_space<vmem>>, vector<128x128xf32>
    %107 = arith.truncf %105 : vector<8x128xf32> to vector<8x128xbf16>
    %108 = arith.truncf %106 : vector<128x128xf32> to vector<128x128xbf16>
    %cst_49 = arith.constant dense<0.000000e+00> : vector<8x128xf32>
    %109 = tpu.matmul %107, %108, %cst_49 {dimension_numbers = #tpu.dot_dimension_numbers<[1], [0], [0], [1], [0, 0, 1, 1], [], []>} : vector<8x128xbf16>, vector<128x128xbf16>, vector<8x128xf32> -> vector<8x128xf32>
    %110 = arith.addf %104, %109 : vector<8x128xf32>
    %c0_50 = arith.constant 0 : index
    %c0_51 = arith.constant 0 : index
    %111 = vector.load %arg6[%c0_50, %c0_51] : memref<1x128xf32, #tpu.memory_space<vmem>>, vector<1x128xf32>
    %112 = vector.broadcast %111 : vector<1x128xf32> to vector<8x128xf32>
    %113 = arith.addf %110, %112 : vector<8x128xf32>
    %cst_52 = arith.constant 0.000000e+00 : f32
    %114 = vector.broadcast %cst_52 : f32 to vector<8x128xf32>
    %115 = arith.maximumf %113, %114 : vector<8x128xf32>
    %c0_53 = arith.constant 0 : index
    %c0_54 = arith.constant 0 : index
    %116 = vector.load %arg5[%c0_53, %c0_54] : memref<128x128xf32, #tpu.memory_space<vmem>>, vector<128x128xf32>
    %117 = arith.truncf %116 : vector<128x128xf32> to vector<128x128xbf16>
    %cst_55 = arith.constant dense<0.000000e+00> : vector<8x128xf32>
    %118 = tpu.matmul %2, %117, %cst_55 {dimension_numbers = #tpu.dot_dimension_numbers<[1], [0], [0], [1], [0, 0, 1, 1], [], []>} : vector<8x128xbf16>, vector<128x128xbf16>, vector<8x128xf32> -> vector<8x128xf32>
    %c0_56 = arith.constant 0 : index
    %c0_57 = arith.constant 0 : index
    %119 = vector.load %arg6[%c0_56, %c0_57] : memref<1x128xf32, #tpu.memory_space<vmem>>, vector<1x128xf32>
    %120 = vector.broadcast %119 : vector<1x128xf32> to vector<8x128xf32>
    %121 = arith.addf %118, %120 : vector<8x128xf32>
    %cst_58 = arith.constant 0.000000e+00 : f32
    %122 = vector.broadcast %cst_58 : f32 to vector<8x128xf32>
    %123 = arith.maximumf %121, %122 : vector<8x128xf32>
    %124 = arith.truncf %123 : vector<8x128xf32> to vector<8x128xbf16>
    %cst_59 = arith.constant dense<0.000000e+00> : vector<40x128xf32>
    %125 = tpu.matmul %66, %124, %cst_59 {dimension_numbers = #tpu.dot_dimension_numbers<[1], [0], [0], [1], [0, 0, 1, 1], [], []>} : vector<40x8xbf16>, vector<8x128xbf16>, vector<40x128xf32> -> vector<40x128xf32>
    %126 = vector.broadcast %67 : vector<40x1xf32> to vector<40x128xf32>
    %127 = arith.mulf %125, %126 : vector<40x128xf32>
    %128 = vector.extract_strided_slice %127 {offsets = [0, 0], sizes = [8, 128], strides = [1, 1]} : vector<40x128xf32> to vector<8x128xf32>
    %c0_60 = arith.constant 0 : index
    %c0_61 = arith.constant 0 : index
    %c0_62 = arith.constant 0 : index
    %129 = vector.load %arg7[%c0_60, %c0_61, %c0_62] : memref<5x128x128xf32, #tpu.memory_space<vmem>>, vector<1x128x128xf32>
    %130 = vector.shape_cast %129 : vector<1x128x128xf32> to vector<128x128xf32>
    %131 = arith.truncf %128 : vector<8x128xf32> to vector<8x128xbf16>
    %132 = arith.truncf %130 : vector<128x128xf32> to vector<128x128xbf16>
    %cst_63 = arith.constant dense<0.000000e+00> : vector<8x128xf32>
    %133 = tpu.matmul %131, %132, %cst_63 {dimension_numbers = #tpu.dot_dimension_numbers<[1], [0], [0], [1], [0, 0, 1, 1], [], []>} : vector<8x128xbf16>, vector<128x128xbf16>, vector<8x128xf32> -> vector<8x128xf32>
    %134 = vector.extract_strided_slice %127 {offsets = [8, 0], sizes = [8, 128], strides = [1, 1]} : vector<40x128xf32> to vector<8x128xf32>
    %c1_64 = arith.constant 1 : index
    %c0_65 = arith.constant 0 : index
    %c0_66 = arith.constant 0 : index
    %135 = vector.load %arg7[%c1_64, %c0_65, %c0_66] : memref<5x128x128xf32, #tpu.memory_space<vmem>>, vector<1x128x128xf32>
    %136 = vector.shape_cast %135 : vector<1x128x128xf32> to vector<128x128xf32>
    %137 = arith.truncf %134 : vector<8x128xf32> to vector<8x128xbf16>
    %138 = arith.truncf %136 : vector<128x128xf32> to vector<128x128xbf16>
    %cst_67 = arith.constant dense<0.000000e+00> : vector<8x128xf32>
    %139 = tpu.matmul %137, %138, %cst_67 {dimension_numbers = #tpu.dot_dimension_numbers<[1], [0], [0], [1], [0, 0, 1, 1], [], []>} : vector<8x128xbf16>, vector<128x128xbf16>, vector<8x128xf32> -> vector<8x128xf32>
    %140 = arith.addf %133, %139 : vector<8x128xf32>
    %141 = vector.extract_strided_slice %127 {offsets = [16, 0], sizes = [8, 128], strides = [1, 1]} : vector<40x128xf32> to vector<8x128xf32>
    %c2_68 = arith.constant 2 : index
    %c0_69 = arith.constant 0 : index
    %c0_70 = arith.constant 0 : index
    %142 = vector.load %arg7[%c2_68, %c0_69, %c0_70] : memref<5x128x128xf32, #tpu.memory_space<vmem>>, vector<1x128x128xf32>
    %143 = vector.shape_cast %142 : vector<1x128x128xf32> to vector<128x128xf32>
    %144 = arith.truncf %141 : vector<8x128xf32> to vector<8x128xbf16>
    %145 = arith.truncf %143 : vector<128x128xf32> to vector<128x128xbf16>
    %cst_71 = arith.constant dense<0.000000e+00> : vector<8x128xf32>
    %146 = tpu.matmul %144, %145, %cst_71 {dimension_numbers = #tpu.dot_dimension_numbers<[1], [0], [0], [1], [0, 0, 1, 1], [], []>} : vector<8x128xbf16>, vector<128x128xbf16>, vector<8x128xf32> -> vector<8x128xf32>
    %147 = arith.addf %140, %146 : vector<8x128xf32>
    %148 = vector.extract_strided_slice %127 {offsets = [24, 0], sizes = [8, 128], strides = [1, 1]} : vector<40x128xf32> to vector<8x128xf32>
    %c3_72 = arith.constant 3 : index
    %c0_73 = arith.constant 0 : index
    %c0_74 = arith.constant 0 : index
    %149 = vector.load %arg7[%c3_72, %c0_73, %c0_74] : memref<5x128x128xf32, #tpu.memory_space<vmem>>, vector<1x128x128xf32>
    %150 = vector.shape_cast %149 : vector<1x128x128xf32> to vector<128x128xf32>
    %151 = arith.truncf %148 : vector<8x128xf32> to vector<8x128xbf16>
    %152 = arith.truncf %150 : vector<128x128xf32> to vector<128x128xbf16>
    %cst_75 = arith.constant dense<0.000000e+00> : vector<8x128xf32>
    %153 = tpu.matmul %151, %152, %cst_75 {dimension_numbers = #tpu.dot_dimension_numbers<[1], [0], [0], [1], [0, 0, 1, 1], [], []>} : vector<8x128xbf16>, vector<128x128xbf16>, vector<8x128xf32> -> vector<8x128xf32>
    %154 = arith.addf %147, %153 : vector<8x128xf32>
    %155 = vector.extract_strided_slice %127 {offsets = [32, 0], sizes = [8, 128], strides = [1, 1]} : vector<40x128xf32> to vector<8x128xf32>
    %c4_76 = arith.constant 4 : index
    %c0_77 = arith.constant 0 : index
    %c0_78 = arith.constant 0 : index
    %156 = vector.load %arg7[%c4_76, %c0_77, %c0_78] : memref<5x128x128xf32, #tpu.memory_space<vmem>>, vector<1x128x128xf32>
    %157 = vector.shape_cast %156 : vector<1x128x128xf32> to vector<128x128xf32>
    %158 = arith.truncf %155 : vector<8x128xf32> to vector<8x128xbf16>
    %159 = arith.truncf %157 : vector<128x128xf32> to vector<128x128xbf16>
    %cst_79 = arith.constant dense<0.000000e+00> : vector<8x128xf32>
    %160 = tpu.matmul %158, %159, %cst_79 {dimension_numbers = #tpu.dot_dimension_numbers<[1], [0], [0], [1], [0, 0, 1, 1], [], []>} : vector<8x128xbf16>, vector<128x128xbf16>, vector<8x128xf32> -> vector<8x128xf32>
    %161 = arith.addf %154, %160 : vector<8x128xf32>
    %c0_80 = arith.constant 0 : index
    %c0_81 = arith.constant 0 : index
    %162 = vector.load %arg8[%c0_80, %c0_81] : memref<128x128xf32, #tpu.memory_space<vmem>>, vector<128x128xf32>
    %163 = arith.truncf %115 : vector<8x128xf32> to vector<8x128xbf16>
    %164 = arith.truncf %162 : vector<128x128xf32> to vector<128x128xbf16>
    %cst_82 = arith.constant dense<0.000000e+00> : vector<8x128xf32>
    %165 = tpu.matmul %163, %164, %cst_82 {dimension_numbers = #tpu.dot_dimension_numbers<[1], [0], [0], [1], [0, 0, 1, 1], [], []>} : vector<8x128xbf16>, vector<128x128xbf16>, vector<8x128xf32> -> vector<8x128xf32>
    %166 = arith.addf %161, %165 : vector<8x128xf32>
    %c0_83 = arith.constant 0 : index
    %c0_84 = arith.constant 0 : index
    %167 = vector.load %arg9[%c0_83, %c0_84] : memref<1x128xf32, #tpu.memory_space<vmem>>, vector<1x128xf32>
    %168 = vector.broadcast %167 : vector<1x128xf32> to vector<8x128xf32>
    %169 = arith.addf %166, %168 : vector<8x128xf32>
    %c0_85 = arith.constant 0 : index
    %c0_86 = arith.constant 0 : index
    %170 = vector.load %arg10[%c0_85, %c0_86] : memref<8x128xf32, #tpu.memory_space<vmem>>, vector<8x128xf32>
    tpu.vector_store %arg10[%c0_85, %c0_86], %169 {strides = array<i32>} : memref<8x128xf32, #tpu.memory_space<vmem>>, vector<8x128xf32>,
    return
  }
  func.func @transform_0(%arg0: i32) -> (i32, i32) {
    %c0_i32 = arith.constant 0 : i32
    %c0_i32_0 = arith.constant 0 : i32
    return %arg0, %c0_i32 : i32, i32
  }
  func.func @transform_1(%arg0: i32) -> (i32, i32) {
    %c0_i32 = arith.constant 0 : i32
    %c0_i32_0 = arith.constant 0 : i32
    return %arg0, %c0_i32 : i32, i32
  }
  func.func @transform_2(%arg0: i32) -> (i32, i32) {
    %c0_i32 = arith.constant 0 : i32
    %c0_i32_0 = arith.constant 0 : i32
    %c0_i32_1 = arith.constant 0 : i32
    return %c0_i32, %c0_i32_0 : i32, i32
  }
  func.func @transform_3(%arg0: i32) -> (i32, i32, i32) {
    %c0_i32 = arith.constant 0 : i32
    %c0_i32_0 = arith.constant 0 : i32
    %c0_i32_1 = arith.constant 0 : i32
    %c0_i32_2 = arith.constant 0 : i32
    return %c0_i32, %c0_i32_0, %c0_i32_1 : i32, i32, i32
  }
  func.func @transform_4(%arg0: i32) -> (i32, i32) {
    %c0_i32 = arith.constant 0 : i32
    %c0_i32_0 = arith.constant 0 : i32
    %c0_i32_1 = arith.constant 0 : i32
    return %c0_i32, %c0_i32_0 : i32, i32
  }
  func.func @transform_5(%arg0: i32) -> (i32, i32) {
    %c0_i32 = arith.constant 0 : i32
    %c0_i32_0 = arith.constant 0 : i32
    %c0_i32_1 = arith.constant 0 : i32
    return %c0_i32, %c0_i32_0 : i32, i32
  }
  func.func @transform_6(%arg0: i32) -> (i32, i32, i32) {
    %c0_i32 = arith.constant 0 : i32
    %c0_i32_0 = arith.constant 0 : i32
    %c0_i32_1 = arith.constant 0 : i32
    %c0_i32_2 = arith.constant 0 : i32
    return %c0_i32, %c0_i32_0, %c0_i32_1 : i32, i32, i32
  }
  func.func @transform_7(%arg0: i32) -> (i32, i32) {
    %c0_i32 = arith.constant 0 : i32
    %c0_i32_0 = arith.constant 0 : i32
    %c0_i32_1 = arith.constant 0 : i32
    return %c0_i32, %c0_i32_0 : i32, i32
  }
  func.func @transform_8(%arg0: i32) -> (i32, i32) {
    %c0_i32 = arith.constant 0 : i32
    %c0_i32_0 = arith.constant 0 : i32
    %c0_i32_1 = arith.constant 0 : i32
    return %c0_i32, %c0_i32_0 : i32, i32
  }
  func.func @transform_9(%arg0: i32) -> (i32, i32) {
    %c0_i32 = arith.constant 0 : i32
    %c0_i32_0 = arith.constant 0 : i32
    return %arg0, %c0_i32 : i32, i32
  }
}

</mosaic_0001>

<llo_original>
// kernel: tpu_custom_call.1
$region0: #{tpu_custom_call.1}
  #allocation0 [shape = 'u32[]', space=smem, size = 0x4, offset = 0x4, fixed_abs, tag = 'smem constant byte address 0x4 - core index']
  #allocation1 [shape = 'u32[144,128]{1,0:T(1,128)}', space=vmem, size = 0x12000, scoped, tag = 'internal scratch']
  %s0 = inlined_call_operand.vmem [shape: f32[16,8], index: 0, kind: input, shape index: {}]
  %s1 = inlined_call_operand.vmem [shape: f32[16,128], index: 1, kind: input, shape index: {}]
  %s2 = inlined_call_operand.vmem [shape: f32[8,128], index: 2, kind: input, shape index: {}]
  %s3 = inlined_call_operand.hbm [shape: f32[5,128,128], index: 3, kind: input, shape index: {}]
  %s4 = inlined_call_operand.hbm [shape: f32[128,128], index: 4, kind: input, shape index: {}]
  %s5 = inlined_call_operand.vmem [shape: f32[1,128], index: 5, kind: input, shape index: {}]
  %s6 = inlined_call_operand.hbm [shape: f32[5,128,128], index: 6, kind: input, shape index: {}]
  %s7 = inlined_call_operand.hbm [shape: f32[128,128], index: 7, kind: input, shape index: {}]
  %s8 = inlined_call_operand.vmem [shape: f32[1,128], index: 8, kind: input, shape index: {}]
  %s9 = inlined_call_operand.hbm [shape: f32[16,128], index: 9, kind: output, shape index: {}]
  %s10 = sld [smem:[#allocation0]]
  $region85: #{tpu_custom_call.1} parent=0
    _
  %s12 = ssub.s32 1, %s10
  %s13 = scalar_select 0, %s12, %s10
  $region1: #{tpu_custom_call.1} parent=0
    #allocation2 [shape = 'u8[327680]{0}', space=vmem, size = 0x50000, scoped, tag = 'input window, operand 3, single buffered']
    #allocation3 [shape = 's32[2]{0}', space=sflag, size = 0x8, scoped, tag = 'scoped memory for tpu_custom_call.1']
    #allocation4 [shape = 's32[2]{0}', space=sflag, size = 0x8, scoped, tag = 'scoped memory for tpu_custom_call.1']
    #allocation5 [shape = 'u8[65536]{0}', space=vmem, size = 0x10000, scoped, tag = 'input window, operand 4, single buffered']
    #allocation6 [shape = 's32[1]{0}', space=sflag, size = 0x4, scoped, tag = 'scoped memory for tpu_custom_call.1']
    #allocation7 [shape = 'u8[327680]{0}', space=vmem, size = 0x50000, scoped, tag = 'input window, operand 6, single buffered']
    #allocation8 [shape = 'u8[65536]{0}', space=vmem, size = 0x10000, scoped, tag = 'input window, operand 7, single buffered']
    #allocation9 [shape = 's32[1]{0}', space=sflag, size = 0x4, scoped, tag = 'scoped memory for tpu_custom_call.1']
    #allocation10 [shape = 'u8[8192]{0}', space=vmem, size = 0x2000, scoped, tag = 'output window, operand 0']
    %14 = vsyncpa [#allocation3], 0
    %15 = vsyncpa [#allocation6], 0
    %16 = vsyncpa [#allocation9], 0
    %17 = vsyncpa [#allocation4], 0
    %s18 = scalar_lea.sflag [#allocation4], 1
    %19 = vsyncpa %s18, 0
    loop: start=0, step=1, limit=4
    $region2: #{tpu_custom_call.1} parent=1 // loop_pre_header
      _
    $region3: #{tpu_custom_call.1} parent=1 // loop_header
      %s21 = sphi 0, %s25
      %p22 = scmp.ge.s32.totalorder %s21, 4
      %s31 = sphi 0, %s33
      %s34 = sphi 0, %s31
      %s35 = sphi 0, %s34
      %s51 = sphi 0, %s35
      %s57 = sphi 0, %s59
      %s60 = sphi 0, %s57
      %s61 = sphi 0, %s60
      %s77 = sphi 0, %s61
      %s81 = sphi 0, %s81
      %s83 = sphi 0, %s81
      %s84 = sphi 0, %s83
      %s98 = sphi 0, %s84
      %s102 = sphi 0, %s102
      %s104 = sphi 0, %s102
      %s105 = sphi 0, %s104
      %s119 = sphi 0, %s105
      %s123 = sphi 0, %s123
      %s125 = sphi 0, %s123
      %s126 = sphi 0, %s125
      %s140 = sphi 0, %s126
      %s144 = sphi 0, %s144
      %s146 = sphi 0, %s144
      %s147 = sphi 0, %s146
      %s161 = sphi 0, %s147
      %s165 = sphi 0, %s165
      %s167 = sphi 0, %s165
      %s168 = sphi 0, %s167
      %s182 = sphi 0, %s168
      %s186 = sphi 0, %s186
      %s188 = sphi 0, %s186
      %s189 = sphi 0, %s188
      %s203 = sphi 0, %s189
      %s207 = sphi 0, %s207
      %s209 = sphi 0, %s207
      %s210 = sphi 0, %s209
      %s224 = sphi 0, %s210
      %s230 = sphi 0, %s232
      %s233 = sphi 0, %s230
      %s234 = sphi 0, %s233
      %s250 = sphi 0, %s234
    $region4: #{tpu_custom_call.1} parent=1 // loop_header_branch
      %24 = sbr.rel (%p22) target = $region8
    $region5: #{tpu_custom_call.1} parent=1 // loop_body
      %s26 = ssub.s32 %s21, 1
      %s27 = ssub.s32 %s21, 2
      %s28 = sadd.s32 %s21, 1
      %s29 = ssub.s32 %s21, %s28
      %p30 = scmp.eq.s32.totalorder %s29, 0
      %s32 = sadd.s32 %s31, 1
      %s33 = scalar_select %p30, %s31, %s32
      %p36 = pneg %p30
      %p37 = scmp.eq.s32.totalorder %s21, 1
      %p38 = por %p36, %p37
      %p39 = scmp.ne.s32.totalorder %s31, %s34
      %p40 = scmp.eq.s32.totalorder %s21, 0
      %p41 = por %p39, %p40
      %p42 = scmp.ne.s32.totalorder %s31, %s34
      %p43 = scmp.eq.s32.totalorder %s26, 1
      %p44 = por %p42, %p43
      %p45 = scmp.ne.s32.totalorder %s34, %s35
      %p46 = scmp.eq.s32.totalorder %s26, 0
      %p47 = por %p45, %p46
      %p48 = scmp.ne.s32.totalorder %s34, %s35
      %p49 = scmp.eq.s32.totalorder %s27, 1
      %p50 = por %p48, %p49
      %p52 = scmp.ne.s32.totalorder %s35, %s51
      %p53 = scmp.eq.s32.totalorder %s27, 0
      %p54 = por %p52, %p53
      %s55 = ssub.s32 %s21, %s28
      %p56 = scmp.eq.s32.totalorder %s55, 0
      %s58 = sadd.s32 %s57, 1
      %s59 = scalar_select %p56, %s57, %s58
      %p62 = pneg %p56
      %p63 = scmp.eq.s32.totalorder %s21, 1
      %p64 = por %p62, %p63
      %p65 = scmp.ne.s32.totalorder %s57, %s60
      %p66 = scmp.eq.s32.totalorder %s21, 0
      %p67 = por %p65, %p66
      %p68 = scmp.ne.s32.totalorder %s57, %s60
      %p69 = scmp.eq.s32.totalorder %s26, 1
      %p70 = por %p68, %p69
      %p71 = scmp.ne.s32.totalorder %s60, %s61
      %p72 = scmp.eq.s32.totalorder %s26, 0
      %p73 = por %p71, %p72
      %p74 = scmp.ne.s32.totalorder %s60, %s61
      %p75 = scmp.eq.s32.totalorder %s27, 1
      %p76 = por %p74, %p75
      %p78 = scmp.ne.s32.totalorder %s61, %s77
      %p79 = scmp.eq.s32.totalorder %s27, 0
      %p80 = por %p78, %p79
      %s82 = sadd.s32 %s81, 1
      %p85 = scmp.eq.s32.totalorder %s21, 1
      %p86 = scmp.ne.s32.totalorder %s81, %s83
      %p87 = scmp.eq.s32.totalorder %s21, 0
      %p88 = por %p86, %p87
      %p89 = scmp.ne.s32.totalorder %s81, %s83
      %p90 = scmp.eq.s32.totalorder %s26, 1
      %p91 = por %p89, %p90
      %p92 = scmp.ne.s32.totalorder %s83, %s84
      %p93 = scmp.eq.s32.totalorder %s26, 0
      %p94 = por %p92, %p93
      %p95 = scmp.ne.s32.totalorder %s83, %s84
      %p96 = scmp.eq.s32.totalorder %s27, 1
      %p97 = por %p95, %p96
      %p99 = scmp.ne.s32.totalorder %s84, %s98
      %p100 = scmp.eq.s32.totalorder %s27, 0
      %p101 = por %p99, %p100
      %s103 = sadd.s32 %s102, 1
      %p106 = scmp.eq.s32.totalorder %s21, 1
      %p107 = scmp.ne.s32.totalorder %s102, %s104
      %p108 = scmp.eq.s32.totalorder %s21, 0
      %p109 = por %p107, %p108
      %p110 = scmp.ne.s32.totalorder %s102, %s104
      %p111 = scmp.eq.s32.totalorder %s26, 1
      %p112 = por %p110, %p111
      %p113 = scmp.ne.s32.totalorder %s104, %s105
      %p114 = scmp.eq.s32.totalorder %s26, 0
      %p115 = por %p113, %p114
      %p116 = scmp.ne.s32.totalorder %s104, %s105
      %p117 = scmp.eq.s32.totalorder %s27, 1
      %p118 = por %p116, %p117
      %p120 = scmp.ne.s32.totalorder %s105, %s119
      %p121 = scmp.eq.s32.totalorder %s27, 0
      %p122 = por %p120, %p121
      %s124 = sadd.s32 %s123, 1
      %p127 = scmp.eq.s32.totalorder %s21, 1
      %p128 = scmp.ne.s32.totalorder %s123, %s125
      %p129 = scmp.eq.s32.totalorder %s21, 0
      %p130 = por %p128, %p129
      %p131 = scmp.ne.s32.totalorder %s123, %s125
      %p132 = scmp.eq.s32.totalorder %s26, 1
      %p133 = por %p131, %p132
      %p134 = scmp.ne.s32.totalorder %s125, %s126
      %p135 = scmp.eq.s32.totalorder %s26, 0
      %p136 = por %p134, %p135
      %p137 = scmp.ne.s32.totalorder %s125, %s126
      %p138 = scmp.eq.s32.totalorder %s27, 1
      %p139 = por %p137, %p138
      %p141 = scmp.ne.s32.totalorder %s126, %s140
      %p142 = scmp.eq.s32.totalorder %s27, 0
      %p143 = por %p141, %p142
      %s145 = sadd.s32 %s144, 1
      %p148 = scmp.eq.s32.totalorder %s21, 1
      %p149 = scmp.ne.s32.totalorder %s144, %s146
      %p150 = scmp.eq.s32.totalorder %s21, 0
      %p151 = por %p149, %p150
      %p152 = scmp.ne.s32.totalorder %s144, %s146
      %p153 = scmp.eq.s32.totalorder %s26, 1
      %p154 = por %p152, %p153
      %p155 = scmp.ne.s32.totalorder %s146, %s147
      %p156 = scmp.eq.s32.totalorder %s26, 0
      %p157 = por %p155, %p156
      %p158 = scmp.ne.s32.totalorder %s146, %s147
      %p159 = scmp.eq.s32.totalorder %s27, 1
      %p160 = por %p158, %p159
      %p162 = scmp.ne.s32.totalorder %s147, %s161
      %p163 = scmp.eq.s32.totalorder %s27, 0
      %p164 = por %p162, %p163
      %s166 = sadd.s32 %s165, 1
      %p169 = scmp.eq.s32.totalorder %s21, 1
      %p170 = scmp.ne.s32.totalorder %s165, %s167
      %p171 = scmp.eq.s32.totalorder %s21, 0
      %p172 = por %p170, %p171
      %p173 = scmp.ne.s32.totalorder %s165, %s167
      %p174 = scmp.eq.s32.totalorder %s26, 1
      %p175 = por %p173, %p174
      %p176 = scmp.ne.s32.totalorder %s167, %s168
      %p177 = scmp.eq.s32.totalorder %s26, 0
      %p178 = por %p176, %p177
      %p179 = scmp.ne.s32.totalorder %s167, %s168
      %p180 = scmp.eq.s32.totalorder %s27, 1
      %p181 = por %p179, %p180
      %p183 = scmp.ne.s32.totalorder %s168, %s182
      %p184 = scmp.eq.s32.totalorder %s27, 0
      %p185 = por %p183, %p184
      %s187 = sadd.s32 %s186, 1
      %p190 = scmp.eq.s32.totalorder %s21, 1
      %p191 = scmp.ne.s32.totalorder %s186, %s188
      %p192 = scmp.eq.s32.totalorder %s21, 0
      %p193 = por %p191, %p192
      %p194 = scmp.ne.s32.totalorder %s186, %s188
      %p195 = scmp.eq.s32.totalorder %s26, 1
      %p196 = por %p194, %p195
      %p197 = scmp.ne.s32.totalorder %s188, %s189
      %p198 = scmp.eq.s32.totalorder %s26, 0
      %p199 = por %p197, %p198
      %p200 = scmp.ne.s32.totalorder %s188, %s189
      %p201 = scmp.eq.s32.totalorder %s27, 1
      %p202 = por %p200, %p201
      %p204 = scmp.ne.s32.totalorder %s189, %s203
      %p205 = scmp.eq.s32.totalorder %s27, 0
      %p206 = por %p204, %p205
      %s208 = sadd.s32 %s207, 1
      %p211 = scmp.eq.s32.totalorder %s21, 1
      %p212 = scmp.ne.s32.totalorder %s207, %s209
      %p213 = scmp.eq.s32.totalorder %s21, 0
      %p214 = por %p212, %p213
      %p215 = scmp.ne.s32.totalorder %s207, %s209
      %p216 = scmp.eq.s32.totalorder %s26, 1
      %p217 = por %p215, %p216
      %p218 = scmp.ne.s32.totalorder %s209, %s210
      %p219 = scmp.eq.s32.totalorder %s26, 0
      %p220 = por %p218, %p219
      %p221 = scmp.ne.s32.totalorder %s209, %s210
      %p222 = scmp.eq.s32.totalorder %s27, 1
      %p223 = por %p221, %p222
      %p225 = scmp.ne.s32.totalorder %s210, %s224
      %p226 = scmp.eq.s32.totalorder %s27, 0
      %p227 = por %p225, %p226
      %s228 = ssub.s32 %s21, %s28
      %p229 = scmp.eq.s32.totalorder %s228, 0
      %s231 = sadd.s32 %s230, 1
      %s232 = scalar_select %p229, %s230, %s231
      %p235 = pneg %p229
      %p236 = scmp.eq.s32.totalorder %s21, 1
      %p237 = por %p235, %p236
      %p238 = scmp.ne.s32.totalorder %s230, %s233
      %p239 = scmp.eq.s32.totalorder %s21, 0
      %p240 = por %p238, %p239
      %p241 = scmp.ne.s32.totalorder %s230, %s233
      %p242 = scmp.eq.s32.totalorder %s26, 1
      %p243 = por %p241, %p242
      %p244 = scmp.ne.s32.totalorder %s233, %s234
      %p245 = scmp.eq.s32.totalorder %s26, 0
      %p246 = por %p244, %p245
      %p247 = scmp.ne.s32.totalorder %s233, %s234
      %p248 = scmp.eq.s32.totalorder %s27, 1
      %p249 = por %p247, %p248
      %p251 = scmp.ne.s32.totalorder %s234, %s250
      %p252 = scmp.eq.s32.totalorder %s27, 0
      %p253 = por %p251, %p252
      %p254 = scmp.le.s32.totalorder 1, %s21
      %p255 = scmp.lt.s32.totalorder %s21, 3
      %p256 = pnand %p254, %p255
      %p257 = pneg %p256
      // Predicated region
      $region9: #{tpu_custom_call.1} parent=5 // pred_check
        _
      $region10: #{tpu_custom_call.1} parent=5 // pred_check_branch
        %259 = sbr.rel (%p256) target = $region12
      $region11: #{tpu_custom_call.1} parent=5 // pred_region
        %s260 = ssub.s32 %s21, 1
        // Predicated region
        $region13: #{tpu_custom_call.1} parent=11 // pred_check
          %p261 = pneg %p94
        $region14: #{tpu_custom_call.1} parent=11 // pred_check_branch
          %263 = sbr.rel (%p261) target = $region16
        $region15: #{tpu_custom_call.1} parent=11 // pred_region
          _
        $region16: #{tpu_custom_call.1} parent=11 // pred_fallthru
          _
        // Predicated region
        $region17: #{tpu_custom_call.1} parent=11 // pred_check
          %p264 = pneg %p115
        $region18: #{tpu_custom_call.1} parent=11 // pred_check_branch
          %266 = sbr.rel (%p264) target = $region20
        $region19: #{tpu_custom_call.1} parent=11 // pred_region
          %s268 = ssub.s32 10240, 10240
          %269 = vsyncadd [#allocation3], %s268
          %s270 = sshll.u32 [#allocation2], 4
          %s271 = int_to_ptr.vmem [resolvable:$true] %s270
          %276 = dma.hbm_to_vmem [thread:$0]  %s3, 10240, %s271, [#allocation3], 128, 128, 8
        $region20: #{tpu_custom_call.1} parent=11 // pred_fallthru
          _
        // Predicated region
        $region21: #{tpu_custom_call.1} parent=11 // pred_check
          %p277 = pneg %p136
        $region22: #{tpu_custom_call.1} parent=11 // pred_check_branch
          %279 = sbr.rel (%p277) target = $region24
        $region23: #{tpu_custom_call.1} parent=11 // pred_region
          %s281 = ssub.s32 2048, 2048
          %282 = vsyncadd [#allocation6], %s281
          %s283 = sshll.u32 [#allocation5], 4
          %s284 = int_to_ptr.vmem [resolvable:$true] %s283
          %289 = dma.hbm_to_vmem [thread:$0]  %s4, 2048, %s284, [#allocation6], 128, 128, 8
        $region24: #{tpu_custom_call.1} parent=11 // pred_fallthru
          _
        // Predicated region
        $region25: #{tpu_custom_call.1} parent=11 // pred_check
          %p290 = pneg %p157
        $region26: #{tpu_custom_call.1} parent=11 // pred_check_branch
          %292 = sbr.rel (%p290) target = $region28
        $region27: #{tpu_custom_call.1} parent=11 // pred_region
          _
        $region28: #{tpu_custom_call.1} parent=11 // pred_fallthru
          _
        // Predicated region
        $region29: #{tpu_custom_call.1} parent=11 // pred_check
          %p293 = pneg %p178
        $region30: #{tpu_custom_call.1} parent=11 // pred_check_branch
          %295 = sbr.rel (%p293) target = $region32
        $region31: #{tpu_custom_call.1} parent=11 // pred_region
          %s297 = ssub.s32 10240, 10240
          %298 = vsyncadd [#allocation6], %s297
          %s299 = sshll.u32 [#allocation7], 4
          %s300 = int_to_ptr.vmem [resolvable:$true] %s299
          %305 = dma.hbm_to_vmem [thread:$0]  %s6, 10240, %s300, [#allocation6], 128, 128, 8
        $region32: #{tpu_custom_call.1} parent=11 // pred_fallthru
          _
        // Predicated region
        $region33: #{tpu_custom_call.1} parent=11 // pred_check
          %p306 = pneg %p199
        $region34: #{tpu_custom_call.1} parent=11 // pred_check_branch
          %308 = sbr.rel (%p306) target = $region36
        $region35: #{tpu_custom_call.1} parent=11 // pred_region
          %s310 = ssub.s32 2048, 2048
          %311 = vsyncadd [#allocation9], %s310
          %s312 = sshll.u32 [#allocation8], 4
          %s313 = int_to_ptr.vmem [resolvable:$true] %s312
          %318 = dma.hbm_to_vmem [thread:$0]  %s7, 2048, %s313, [#allocation9], 128, 128, 8
        $region36: #{tpu_custom_call.1} parent=11 // pred_fallthru
          _
        // Predicated region
        $region37: #{tpu_custom_call.1} parent=11 // pred_check
          %p319 = pneg %p220
        $region38: #{tpu_custom_call.1} parent=11 // pred_check_branch
          %321 = sbr.rel (%p319) target = $region40
        $region39: #{tpu_custom_call.1} parent=11 // pred_region
          _
        $region40: #{tpu_custom_call.1} parent=11 // pred_fallthru
          _
      $region12: #{tpu_custom_call.1} parent=5 // pred_fallthru
        _
      %p322 = scmp.lt.s32.totalorder %s21, 2
      // Predicated region
      $region41: #{tpu_custom_call.1} parent=5 // pred_check
        %p323 = pneg %p322
      $region42: #{tpu_custom_call.1} parent=5 // pred_check_branch
        %325 = sbr.rel (%p323) target = $region44
      $region43: #{tpu_custom_call.1} parent=5 // pred_region
        // Predicated region
        $region45: #{tpu_custom_call.1} parent=43 // pred_check
          %p326 = pneg %p41
        $region46: #{tpu_custom_call.1} parent=43 // pred_check_branch
          %328 = sbr.rel (%p326) target = $region48
        $region47: #{tpu_custom_call.1} parent=43 // pred_region
          %p329 = scmp.lt.s32.totalorder %s21, 1
          %s330 = scalar_select %p329, %s21, 1
          %s331 = smul.addr %s330, 8
          %s332 = scalar_lea.vmem %s0, %s331
        $region48: #{tpu_custom_call.1} parent=43 // pred_fallthru
          _
        // Predicated region
        $region49: #{tpu_custom_call.1} parent=43 // pred_check
          %p333 = pneg %p67
        $region50: #{tpu_custom_call.1} parent=43 // pred_check_branch
          %335 = sbr.rel (%p333) target = $region52
        $region51: #{tpu_custom_call.1} parent=43 // pred_region
          %p336 = scmp.lt.s32.totalorder %s21, 1
          %s337 = scalar_select %p336, %s21, 1
          %s338 = smul.addr %s337, 8
          %s339 = scalar_lea.vmem %s1, %s338
        $region52: #{tpu_custom_call.1} parent=43 // pred_fallthru
          _
      $region44: #{tpu_custom_call.1} parent=5 // pred_fallthru
        _
      %p340 = scmp.le.s32.totalorder 1, %s21
      %p341 = scmp.lt.s32.totalorder %s21, 3
      %p342 = pnand %p340, %p341
      %p343 = pneg %p342
      // Predicated region
      $region53: #{tpu_custom_call.1} parent=5 // pred_check
        _
      $region54: #{tpu_custom_call.1} parent=5 // pred_check_branch
        %345 = sbr.rel (%p342) target = $region56
      $region55: #{tpu_custom_call.1} parent=5 // pred_region
        %s346 = ssub.s32 %s21, 1
        // Predicated region
        $region57: #{tpu_custom_call.1} parent=55 // pred_check
          %p347 = pneg %p115
        $region58: #{tpu_custom_call.1} parent=55 // pred_check_branch
          %349 = sbr.rel (%p347) target = $region60
        $region59: #{tpu_custom_call.1} parent=55 // pred_region
          %350 = dma.done [#allocation3], 10240
        $region60: #{tpu_custom_call.1} parent=55 // pred_fallthru
          _
        // Predicated region
        $region61: #{tpu_custom_call.1} parent=55 // pred_check
          %p351 = pneg %p136
        $region62: #{tpu_custom_call.1} parent=55 // pred_check_branch
          %353 = sbr.rel (%p351) target = $region64
        $region63: #{tpu_custom_call.1} parent=55 // pred_region
          %354 = dma.done [#allocation6], 2048
        $region64: #{tpu_custom_call.1} parent=55 // pred_fallthru
          _
        // Predicated region
        $region65: #{tpu_custom_call.1} parent=55 // pred_check
          %p355 = pneg %p178
        $region66: #{tpu_custom_call.1} parent=55 // pred_check_branch
          %357 = sbr.rel (%p355) target = $region68
        $region67: #{tpu_custom_call.1} parent=55 // pred_region
          %358 = dma.done [#allocation6], 10240
        $region68: #{tpu_custom_call.1} parent=55 // pred_fallthru
          _
        // Predicated region
        $region69: #{tpu_custom_call.1} parent=55 // pred_check
          %p359 = pneg %p199
        $region70: #{tpu_custom_call.1} parent=55 // pred_check_branch
          %361 = sbr.rel (%p359) target = $region72
        $region71: #{tpu_custom_call.1} parent=55 // pred_region
          %362 = dma.done [#allocation9], 2048
        $region72: #{tpu_custom_call.1} parent=55 // pred_fallthru
          _
        %p363 = scmp.lt.s32.totalorder %s26, 1
        %s364 = scalar_select %p363, %s26, 1
        %s365 = smul.addr %s364, 8
        %s366 = scalar_lea.vmem %s0, %s365
        %p367 = pneg %p47
        %p368 = pneg %p44
        %p369 = scmp.lt.s32.totalorder %s26, 1
        %s370 = scalar_select %p369, %s26, 1
        %s371 = smul.addr %s370, 8
        %s372 = scalar_lea.vmem %s1, %s371
        %p373 = pneg %p73
        %p374 = pneg %p70
        %p375 = pneg %p94
        %p376 = pneg %p91
        %p377 = pneg %p115
        %p378 = pneg %p112
        %p379 = pneg %p136
        %p380 = pneg %p133
        %p381 = pneg %p157
        %p382 = pneg %p154
        %p383 = pneg %p178
        %p384 = pneg %p175
        %p385 = pneg %p199
        %p386 = pneg %p196
        %p387 = pneg %p220
        %p388 = pneg %p217
        %p389 = pneg %p246
        %p390 = pneg %p243
        %s391 = sand.u32 %s233, 1
        %s392 = scalar_lea.sflag [#allocation4], %s391
        %s393 = sand.u32 %s233, 1
        %s394 = smul.addr %s393, 8
        %s395 = scalar_lea.vmem [#allocation10], %s394
        %p396 = scmp.lt.s32.totalorder %s26, 1
        %s397 = scalar_select %p396, %s26, 1
        %s398 = smul.addr %s397, 8
        %s399 = scalar_lea.vmem %s0, %s398
        %p400 = scmp.lt.s32.totalorder %s26, 1
        %s401 = scalar_select %p400, %s26, 1
        %s402 = smul.addr %s401, 8
        %s403 = scalar_lea.vmem %s1, %s402
        %v405 = vld [vmem:[%s399] sm:$0xff]
        %v406 = vld [vmem:[%s2] sm:$0xff]
        %v407 = vpack.c.bf16 %v406, %v406
        %vm408 = vcmp.gt.f32.partialorder %v405, 0.16666667
        %vm409 = vcmp.gt.f32.partialorder %v405, 0.33333334
        %vm410 = vcmp.gt.f32.partialorder %v405, 0.5
        %vm411 = vcmp.gt.f32.partialorder %v405, 0.6666667
        %vm412 = vcmp.gt.f32.partialorder %v405, 0.8333333
        %vm413 = vcmp.gt.f32.partialorder %v405, 1.0
        %vm414 = vmxor %vm409, 1
        %vm415 = vmand %vm408, %vm414
        %v416 = vsel %vm415, 1, 0
        %v417 = vcvt.s32.f32 %v416
        %vm418 = vcmask 64512
        %v419 = vsel %vm418, %v417, 0.0
        %420 = vadd.xlane.f32.xlu0 %v419
        %v421 = vpop.xlane.xlu0 %420
        %v422 = vmax.f32 %v421, 1.0
        %v423 = vrcp.pop %v422
        %v424 = vmul.f32 1.0, %v423
        %vm425 = vmxor %vm410, 1
        %vm426 = vmand %vm409, %vm425
        %v427 = vsel %vm426, 1, 0
        %v428 = vcvt.s32.f32 %v427
        %v429 = vsel %vm418, %v428, 0.0
        %430 = vadd.xlane.f32.xlu0 %v429
        %v431 = vpop.xlane.xlu0 %430
        %v432 = vmax.f32 %v431, 1.0
        %v433 = vrcp.pop %v432
        %v434 = vmul.f32 1.0, %v433
        %vm435 = vmxor %vm411, 1
        %vm436 = vmand %vm410, %vm435
        %v437 = vsel %vm436, 1, 0
        %v438 = vcvt.s32.f32 %v437
        %v439 = vsel %vm418, %v438, 0.0
        %440 = vadd.xlane.f32.xlu0 %v439
        %v441 = vpop.xlane.xlu0 %440
        %v442 = vmax.f32 %v441, 1.0
        %v443 = vrcp.pop %v442
        %v444 = vmul.f32 1.0, %v443
        %vm445 = vmxor %vm412, 1
        %vm446 = vmand %vm411, %vm445
        %v447 = vsel %vm446, 1, 0
        %v448 = vcvt.s32.f32 %v447
        %v449 = vsel %vm418, %v448, 0.0
        %450 = vadd.xlane.f32.xlu0 %v449
        %v451 = vpop.xlane.xlu0 %450
        %v452 = vmax.f32 %v451, 1.0
        %v453 = vrcp.pop %v452
        %v454 = vmul.f32 1.0, %v453
        %vm455 = vmxor %vm413, 1
        %vm456 = vmand %vm412, %vm455
        %v457 = vsel %vm456, 1, 0
        %v458 = vcvt.s32.f32 %v457
        %v459 = vsel %vm418, %v458, 0.0
        %460 = vadd.xlane.f32.xlu0 %v459
        %v461 = vpop.xlane.xlu0 %460
        %v462 = vmax.f32 %v461, 1.0
        %v463 = vrcp.pop %v462
        %v464 = vmul.f32 1.0, %v463
        %v465 = vpack.c.bf16 %v428, %v417
        %v466 = vpack.c.bf16 %v448, %v438
        %v467 = vpack.c.bf16 %v458, %v458
        %v469 = vsel %vm418, %v465, 0
        %v472 = vsel %vm418, %v466, 0
        %v475 = vsel %vm418, %v467, 0
        %vm477 = vcmask 1043456
        %v479 = vsel %vm477, %v407, 0
        %481 = vmatprep.subr.bf16.mxu0 0
        %482 = vmatpush1.bf16.msra.mxu0 0
        %483 = vmatprep.subr.bf16.mxu0 0
        %484 = vmatpush1.bf16.msra.mxu0 0
        %485 = vmatprep.subr.bf16.mxu0 0
        %486 = vmatpush1.bf16.msra.mxu0 0
        %487 = vmatprep.subr.bf16.mxu0 0
        %488 = vmatpush1.bf16.msra.mxu0 0
        %489 = vmatprep.subr.bf16.mxu0 0
        %490 = vmatpush1.bf16.msra.mxu0 0
        %491 = vmatprep.subr.bf16.mxu0 0
        %492 = vmatpush1.bf16.msra.mxu0 0
        %493 = vmatprep.subr.bf16.mxu0 0
        %494 = vmatpush1.bf16.msra.mxu0 0
        %495 = vmatprep.subr.bf16.mxu0 0
        %496 = vmatpush1.bf16.msra.mxu0 %v479
        %497 = vmatprep.subr.bf16.mxu0 0
        %498 = vmatpush2.bf16.msra.mxu0 0
        %499 = vmatprep.subr.bf16.mxu0 0
        %500 = vmatpush2.bf16.msra.mxu0 0
        %501 = vmatprep.subr.bf16.mxu0 0
        %502 = vmatpush2.bf16.msra.mxu0 0
        %503 = vmatprep.subr.bf16.mxu0 0
        %504 = vmatpush2.bf16.msra.mxu0 0
        %505 = vmatprep.subr.bf16.mxu0 0
        %506 = vmatpush2.bf16.msra.mxu0 0
        %507 = vmatprep.subr.bf16.mxu0 0
        %508 = vmatpush2.bf16.msra.mxu0 0
        %509 = vmatprep.subr.bf16.mxu0 0
        %510 = vmatpush2.bf16.msra.mxu0 0
        %511 = vmatprep.subr.bf16.mxu0 0
        %512 = vmatpush2.bf16.msra.mxu0 0
        %513 = vmatprep.mubr.bf16.mxu0 0
        %514 = vmatmul.mubr.bf16.gmra.mxu0 %v469
        %v515 = vpop.f32.mrf.mxu0
        %v516 = vadd.f32 0.0, %v515
        %v517 = vpop.f32.mrf.mxu0
        %v518 = vpop.f32.mrf.mxu0
        %v519 = vadd.f32 0.0, %v518
        %v520 = vpop.f32.mrf.mxu0
        %521 = vmatprep.mubr.bf16.mxu0 0
        %522 = vmatmul.mubr.bf16.gmra.mxu0 %v472
        %v523 = vpop.f32.mrf.mxu0
        %v524 = vadd.f32 0.0, %v523
        %v525 = vpop.f32.mrf.mxu0
        %v526 = vpop.f32.mrf.mxu0
        %v527 = vadd.f32 0.0, %v526
        %v528 = vpop.f32.mrf.mxu0
        %529 = vmatprep.mubr.bf16.mxu0 0
        %530 = vmatmul.mubr.bf16.gmra.mxu0 %v475
        %v531 = vpop.f32.mrf.mxu0
        %v532 = vadd.f32 0.0, %v531
        %v533 = vpop.f32.mrf.mxu0
        %v534 = vpop.f32.mrf.mxu0
        %v535 = vpop.f32.mrf.mxu0
        %536 = vdwg.mxu0
        %538 = vset.pattern.permute.xlu0 0
        %539 = vperm.xlu0 %538, %v424
        %v540 = vpop.permute.xlu0 %539
        %543 = vset.pattern.permute.xlu0 0
        %544 = vperm.xlu0 %543, %v434
        %v545 = vpop.permute.xlu0 %544
        %548 = vset.pattern.permute.xlu0 0
        %549 = vperm.xlu0 %548, %v444
        %v550 = vpop.permute.xlu0 %549
        %553 = vset.pattern.permute.xlu0 0
        %554 = vperm.xlu0 %553, %v454
        %v555 = vpop.permute.xlu0 %554
        %558 = vset.pattern.permute.xlu0 0
        %559 = vperm.xlu0 %558, %v464
        %v560 = vpop.permute.xlu0 %559
        %v562 = vmul.f32 %v516, %v540
        %v563 = vmul.f32 %v519, %v545
        %v564 = vmul.f32 %v524, %v550
        %v565 = vmul.f32 %v527, %v555
        %v566 = vmul.f32 %v532, %v560
        %v567 = vld [vmem:[#allocation2] sm:$0xff]
        %v568 = vld [vmem:[#allocation2 + $0x8] sm:$0xff]
        %v569 = vld [vmem:[#allocation2 + $0x10] sm:$0xff]
        %v570 = vld [vmem:[#allocation2 + $0x18] sm:$0xff]
        %v571 = vld [vmem:[#allocation2 + $0x20] sm:$0xff]
        %v572 = vld [vmem:[#allocation2 + $0x28] sm:$0xff]
        %v573 = vld [vmem:[#allocation2 + $0x30] sm:$0xff]
        %v574 = vld [vmem:[#allocation2 + $0x38] sm:$0xff]
        %v575 = vld [vmem:[#allocation2 + $0x40] sm:$0xff]
        %v576 = vld [vmem:[#allocation2 + $0x48] sm:$0xff]
        %v577 = vld [vmem:[#allocation2 + $0x50] sm:$0xff]
        %v578 = vld [vmem:[#allocation2 + $0x58] sm:$0xff]
        %v579 = vld [vmem:[#allocation2 + $0x60] sm:$0xff]
        %v580 = vld [vmem:[#allocation2 + $0x68] sm:$0xff]
        %v581 = vld [vmem:[#allocation2 + $0x70] sm:$0xff]
        %v582 = vld [vmem:[#allocation2 + $0x78] sm:$0xff]
        %v583 = vpack.c.bf16 %v562, %v562
        %v584 = vpack.c.bf16 %v568, %v567
        %v585 = vpack.c.bf16 %v570, %v569
        %v586 = vpack.c.bf16 %v572, %v571
        %v587 = vpack.c.bf16 %v574, %v573
        %v588 = vpack.c.bf16 %v576, %v575
        %v589 = vpack.c.bf16 %v578, %v577
        %v590 = vpack.c.bf16 %v580, %v579
        %v591 = vpack.c.bf16 %v582, %v581
        %s592 = scalar_lea.vmem [#allocation2], 128
        %v593 = vld [vmem:[%s592] sm:$0xff]
        %v594 = vld [vmem:[%s592 + $0x8] sm:$0xff]
        %v595 = vld [vmem:[%s592 + $0x10] sm:$0xff]
        %v596 = vld [vmem:[%s592 + $0x18] sm:$0xff]
        %v597 = vld [vmem:[%s592 + $0x20] sm:$0xff]
        %v598 = vld [vmem:[%s592 + $0x28] sm:$0xff]
        %v599 = vld [vmem:[%s592 + $0x30] sm:$0xff]
        %v600 = vld [vmem:[%s592 + $0x38] sm:$0xff]
        %v601 = vld [vmem:[%s592 + $0x40] sm:$0xff]
        %v602 = vld [vmem:[%s592 + $0x48] sm:$0xff]
        %v603 = vld [vmem:[%s592 + $0x50] sm:$0xff]
        %v604 = vld [vmem:[%s592 + $0x58] sm:$0xff]
        %v605 = vld [vmem:[%s592 + $0x60] sm:$0xff]
        %v606 = vld [vmem:[%s592 + $0x68] sm:$0xff]
        %v607 = vld [vmem:[%s592 + $0x70] sm:$0xff]
        %v608 = vld [vmem:[%s592 + $0x78] sm:$0xff]
        %v609 = vpack.c.bf16 %v563, %v563
        %v610 = vpack.c.bf16 %v594, %v593
        %v611 = vpack.c.bf16 %v596, %v595
        %v612 = vpack.c.bf16 %v598, %v597
        %v613 = vpack.c.bf16 %v600, %v599
        %v614 = vpack.c.bf16 %v602, %v601
        %v615 = vpack.c.bf16 %v604, %v603
        %v616 = vpack.c.bf16 %v606, %v605
        %v617 = vpack.c.bf16 %v608, %v607
        %618 = vmatprep.subr.bf16.mxu0 0
        %619 = vmatpush1.bf16.msra.mxu0 %v617
        %620 = vmatprep.subr.bf16.mxu0 0
        %621 = vmatpush1.bf16.msra.mxu0 %v616
        %622 = vmatprep.subr.bf16.mxu0 0
        %623 = vmatpush1.bf16.msra.mxu0 %v615
        %624 = vmatprep.subr.bf16.mxu0 0
        %625 = vmatpush1.bf16.msra.mxu0 %v614
        %626 = vmatprep.subr.bf16.mxu0 0
        %627 = vmatpush1.bf16.msra.mxu0 %v613
        %628 = vmatprep.subr.bf16.mxu0 0
        %629 = vmatpush1.bf16.msra.mxu0 %v612
        %630 = vmatprep.subr.bf16.mxu0 0
        %631 = vmatpush1.bf16.msra.mxu0 %v611
        %632 = vmatprep.subr.bf16.mxu0 0
        %633 = vmatpush1.bf16.msra.mxu0 %v610
        %634 = vmatprep.subr.bf16.mxu0 0
        %635 = vmatpush2.bf16.msra.mxu0 0
        %636 = vmatprep.subr.bf16.mxu0 0
        %637 = vmatpush2.bf16.msra.mxu0 0
        %638 = vmatprep.subr.bf16.mxu0 0
        %639 = vmatpush2.bf16.msra.mxu0 0
        %640 = vmatprep.subr.bf16.mxu0 0
        %641 = vmatpush2.bf16.msra.mxu0 0
        %642 = vmatprep.subr.bf16.mxu0 0
        %643 = vmatpush2.bf16.msra.mxu0 0
        %644 = vmatprep.subr.bf16.mxu0 0
        %645 = vmatpush2.bf16.msra.mxu0 0
        %646 = vmatprep.subr.bf16.mxu0 0
        %647 = vmatpush2.bf16.msra.mxu0 0
        %648 = vmatprep.subr.bf16.mxu0 0
        %649 = vmatpush2.bf16.msra.mxu0 0
        %650 = vmatprep.mubr.bf16.mxu0 0
        %651 = vmatmul.mubr.bf16.gmra.mxu0 %v609
        %v652 = vpop.f32.mrf.mxu0
        %v653 = vadd.f32 0.0, %v652
        %v654 = vpop.f32.mrf.mxu0
        %v655 = vpop.f32.mrf.mxu0
        %v656 = vpop.f32.mrf.mxu0
        %657 = vdwg.mxu0
        %658 = vmatprep.subr.bf16.mxu0 0
        %659 = vmatpush1.bf16.msra.mxu0 %v591
        %660 = vmatprep.subr.bf16.mxu0 0
        %661 = vmatpush1.bf16.msra.mxu0 %v590
        %662 = vmatprep.subr.bf16.mxu0 0
        %663 = vmatpush1.bf16.msra.mxu0 %v589
        %664 = vmatprep.subr.bf16.mxu0 0
        %665 = vmatpush1.bf16.msra.mxu0 %v588
        %666 = vmatprep.subr.bf16.mxu0 0
        %667 = vmatpush1.bf16.msra.mxu0 %v587
        %668 = vmatprep.subr.bf16.mxu0 0
        %669 = vmatpush1.bf16.msra.mxu0 %v586
        %670 = vmatprep.subr.bf16.mxu0 0
        %671 = vmatpush1.bf16.msra.mxu0 %v585
        %672 = vmatprep.subr.bf16.mxu0 0
        %673 = vmatpush1.bf16.msra.mxu0 %v584
        %674 = vmatprep.subr.bf16.mxu0 0
        %675 = vmatpush2.bf16.msra.mxu0 0
        %676 = vmatprep.subr.bf16.mxu0 0
        %677 = vmatpush2.bf16.msra.mxu0 0
        %678 = vmatprep.subr.bf16.mxu0 0
        %679 = vmatpush2.bf16.msra.mxu0 0
        %680 = vmatprep.subr.bf16.mxu0 0
        %681 = vmatpush2.bf16.msra.mxu0 0
        %682 = vmatprep.subr.bf16.mxu0 0
        %683 = vmatpush2.bf16.msra.mxu0 0
        %684 = vmatprep.subr.bf16.mxu0 0
        %685 = vmatpush2.bf16.msra.mxu0 0
        %686 = vmatprep.subr.bf16.mxu0 0
        %687 = vmatpush2.bf16.msra.mxu0 0
        %688 = vmatprep.subr.bf16.mxu0 0
        %689 = vmatpush2.bf16.msra.mxu0 0
        %690 = vmatprep.mubr.bf16.mxu0 0
        %691 = vmatmul.mubr.bf16.gmra.mxu0 %v583
        %v692 = vpop.f32.mrf.mxu0
        %v693 = vadd.f32 %v653, %v692
        %v694 = vpop.f32.mrf.mxu0
        %v695 = vpop.f32.mrf.mxu0
        %v696 = vpop.f32.mrf.mxu0
        %697 = vdwg.mxu0
        %s698 = scalar_lea.vmem [#allocation2], 256
        %v699 = vld [vmem:[%s698] sm:$0xff]
        %v700 = vld [vmem:[%s698 + $0x8] sm:$0xff]
        %v701 = vld [vmem:[%s698 + $0x10] sm:$0xff]
        %v702 = vld [vmem:[%s698 + $0x18] sm:$0xff]
        %v703 = vld [vmem:[%s698 + $0x20] sm:$0xff]
        %v704 = vld [vmem:[%s698 + $0x28] sm:$0xff]
        %v705 = vld [vmem:[%s698 + $0x30] sm:$0xff]
        %v706 = vld [vmem:[%s698 + $0x38] sm:$0xff]
        %v707 = vld [vmem:[%s698 + $0x40] sm:$0xff]
        %v708 = vld [vmem:[%s698 + $0x48] sm:$0xff]
        %v709 = vld [vmem:[%s698 + $0x50] sm:$0xff]
        %v710 = vld [vmem:[%s698 + $0x58] sm:$0xff]
        %v711 = vld [vmem:[%s698 + $0x60] sm:$0xff]
        %v712 = vld [vmem:[%s698 + $0x68] sm:$0xff]
        %v713 = vld [vmem:[%s698 + $0x70] sm:$0xff]
        %v714 = vld [vmem:[%s698 + $0x78] sm:$0xff]
        %v715 = vpack.c.bf16 %v564, %v564
        %v716 = vpack.c.bf16 %v700, %v699
        %v717 = vpack.c.bf16 %v702, %v701
        %v718 = vpack.c.bf16 %v704, %v703
        %v719 = vpack.c.bf16 %v706, %v705
        %v720 = vpack.c.bf16 %v708, %v707
        %v721 = vpack.c.bf16 %v710, %v709
        %v722 = vpack.c.bf16 %v712, %v711
        %v723 = vpack.c.bf16 %v714, %v713
        %724 = vmatprep.subr.bf16.mxu0 0
        %725 = vmatpush1.bf16.msra.mxu0 %v723
        %726 = vmatprep.subr.bf16.mxu0 0
        %727 = vmatpush1.bf16.msra.mxu0 %v722
        %728 = vmatprep.subr.bf16.mxu0 0
        %729 = vmatpush1.bf16.msra.mxu0 %v721
        %730 = vmatprep.subr.bf16.mxu0 0
        %731 = vmatpush1.bf16.msra.mxu0 %v720
        %732 = vmatprep.subr.bf16.mxu0 0
        %733 = vmatpush1.bf16.msra.mxu0 %v719
        %734 = vmatprep.subr.bf16.mxu0 0
        %735 = vmatpush1.bf16.msra.mxu0 %v718
        %736 = vmatprep.subr.bf16.mxu0 0
        %737 = vmatpush1.bf16.msra.mxu0 %v717
        %738 = vmatprep.subr.bf16.mxu0 0
        %739 = vmatpush1.bf16.msra.mxu0 %v716
        %740 = vmatprep.subr.bf16.mxu0 0
        %741 = vmatpush2.bf16.msra.mxu0 0
        %742 = vmatprep.subr.bf16.mxu0 0
        %743 = vmatpush2.bf16.msra.mxu0 0
        %744 = vmatprep.subr.bf16.mxu0 0
        %745 = vmatpush2.bf16.msra.mxu0 0
        %746 = vmatprep.subr.bf16.mxu0 0
        %747 = vmatpush2.bf16.msra.mxu0 0
        %748 = vmatprep.subr.bf16.mxu0 0
        %749 = vmatpush2.bf16.msra.mxu0 0
        %750 = vmatprep.subr.bf16.mxu0 0
        %751 = vmatpush2.bf16.msra.mxu0 0
        %752 = vmatprep.subr.bf16.mxu0 0
        %753 = vmatpush2.bf16.msra.mxu0 0
        %754 = vmatprep.subr.bf16.mxu0 0
        %755 = vmatpush2.bf16.msra.mxu0 0
        %756 = vmatprep.mubr.bf16.mxu0 0
        %757 = vmatmul.mubr.bf16.gmra.mxu0 %v715
        %v758 = vpop.f32.mrf.mxu0
        %v759 = vadd.f32 0.0, %v758
        %v760 = vpop.f32.mrf.mxu0
        %v761 = vpop.f32.mrf.mxu0
        %v762 = vpop.f32.mrf.mxu0
        %763 = vdwg.mxu0
        %v764 = vadd.f32 %v693, %v759
        %s765 = scalar_lea.vmem [#allocation2], 384
        %v766 = vld [vmem:[%s765] sm:$0xff]
        %v767 = vld [vmem:[%s765 + $0x8] sm:$0xff]
        %v768 = vld [vmem:[%s765 + $0x10] sm:$0xff]
        %v769 = vld [vmem:[%s765 + $0x18] sm:$0xff]
        %v770 = vld [vmem:[%s765 + $0x20] sm:$0xff]
        %v771 = vld [vmem:[%s765 + $0x28] sm:$0xff]
        %v772 = vld [vmem:[%s765 + $0x30] sm:$0xff]
        %v773 = vld [vmem:[%s765 + $0x38] sm:$0xff]
        %v774 = vld [vmem:[%s765 + $0x40] sm:$0xff]
        %v775 = vld [vmem:[%s765 + $0x48] sm:$0xff]
        %v776 = vld [vmem:[%s765 + $0x50] sm:$0xff]
        %v777 = vld [vmem:[%s765 + $0x58] sm:$0xff]
        %v778 = vld [vmem:[%s765 + $0x60] sm:$0xff]
        %v779 = vld [vmem:[%s765 + $0x68] sm:$0xff]
        %v780 = vld [vmem:[%s765 + $0x70] sm:$0xff]
        %v781 = vld [vmem:[%s765 + $0x78] sm:$0xff]
        %v782 = vpack.c.bf16 %v565, %v565
        %v783 = vpack.c.bf16 %v767, %v766
        %v784 = vpack.c.bf16 %v769, %v768
        %v785 = vpack.c.bf16 %v771, %v770
        %v786 = vpack.c.bf16 %v773, %v772
        %v787 = vpack.c.bf16 %v775, %v774
        %v788 = vpack.c.bf16 %v777, %v776
        %v789 = vpack.c.bf16 %v779, %v778
        %v790 = vpack.c.bf16 %v781, %v780
        %791 = vmatprep.subr.bf16.mxu0 0
        %792 = vmatpush1.bf16.msra.mxu0 %v790
        %793 = vmatprep.subr.bf16.mxu0 0
        %794 = vmatpush1.bf16.msra.mxu0 %v789
        %795 = vmatprep.subr.bf16.mxu0 0
        %796 = vmatpush1.bf16.msra.mxu0 %v788
        %797 = vmatprep.subr.bf16.mxu0 0
        %798 = vmatpush1.bf16.msra.mxu0 %v787
        %799 = vmatprep.subr.bf16.mxu0 0
        %800 = vmatpush1.bf16.msra.mxu0 %v786
        %801 = vmatprep.subr.bf16.mxu0 0
        %802 = vmatpush1.bf16.msra.mxu0 %v785
        %803 = vmatprep.subr.bf16.mxu0 0
        %804 = vmatpush1.bf16.msra.mxu0 %v784
        %805 = vmatprep.subr.bf16.mxu0 0
        %806 = vmatpush1.bf16.msra.mxu0 %v783
        %807 = vmatprep.subr.bf16.mxu0 0
        %808 = vmatpush2.bf16.msra.mxu0 0
        %809 = vmatprep.subr.bf16.mxu0 0
        %810 = vmatpush2.bf16.msra.mxu0 0
        %811 = vmatprep.subr.bf16.mxu0 0
        %812 = vmatpush2.bf16.msra.mxu0 0
        %813 = vmatprep.subr.bf16.mxu0 0
        %814 = vmatpush2.bf16.msra.mxu0 0
        %815 = vmatprep.subr.bf16.mxu0 0
        %816 = vmatpush2.bf16.msra.mxu0 0
        %817 = vmatprep.subr.bf16.mxu0 0
        %818 = vmatpush2.bf16.msra.mxu0 0
        %819 = vmatprep.subr.bf16.mxu0 0
        %820 = vmatpush2.bf16.msra.mxu0 0
        %821 = vmatprep.subr.bf16.mxu0 0
        %822 = vmatpush2.bf16.msra.mxu0 0
        %823 = vmatprep.mubr.bf16.mxu0 0
        %824 = vmatmul.mubr.bf16.gmra.mxu0 %v782
        %v825 = vpop.f32.mrf.mxu0
        %v826 = vadd.f32 0.0, %v825
        %v827 = vpop.f32.mrf.mxu0
        %v828 = vpop.f32.mrf.mxu0
        %v829 = vpop.f32.mrf.mxu0
        %830 = vdwg.mxu0
        %v831 = vadd.f32 %v764, %v826
        %s832 = scalar_lea.vmem [#allocation2], 512
        %v833 = vld [vmem:[%s832] sm:$0xff]
        %v834 = vld [vmem:[%s832 + $0x8] sm:$0xff]
        %v835 = vld [vmem:[%s832 + $0x10] sm:$0xff]
        %v836 = vld [vmem:[%s832 + $0x18] sm:$0xff]
        %v837 = vld [vmem:[%s832 + $0x20] sm:$0xff]
        %v838 = vld [vmem:[%s832 + $0x28] sm:$0xff]
        %v839 = vld [vmem:[%s832 + $0x30] sm:$0xff]
        %v840 = vld [vmem:[%s832 + $0x38] sm:$0xff]
        %v841 = vld [vmem:[%s832 + $0x40] sm:$0xff]
        %v842 = vld [vmem:[%s832 + $0x48] sm:$0xff]
        %v843 = vld [vmem:[%s832 + $0x50] sm:$0xff]
        %v844 = vld [vmem:[%s832 + $0x58] sm:$0xff]
        %v845 = vld [vmem:[%s832 + $0x60] sm:$0xff]
        %v846 = vld [vmem:[%s832 + $0x68] sm:$0xff]
        %v847 = vld [vmem:[%s832 + $0x70] sm:$0xff]
        %v848 = vld [vmem:[%s832 + $0x78] sm:$0xff]
        %v849 = vpack.c.bf16 %v566, %v566
        %v850 = vpack.c.bf16 %v834, %v833
        %v851 = vpack.c.bf16 %v836, %v835
        %v852 = vpack.c.bf16 %v838, %v837
        %v853 = vpack.c.bf16 %v840, %v839
        %v854 = vpack.c.bf16 %v842, %v841
        %v855 = vpack.c.bf16 %v844, %v843
        %v856 = vpack.c.bf16 %v846, %v845
        %v857 = vpack.c.bf16 %v848, %v847
        %858 = vmatprep.subr.bf16.mxu0 0
        %859 = vmatpush1.bf16.msra.mxu0 %v857
        %860 = vmatprep.subr.bf16.mxu0 0
        %861 = vmatpush1.bf16.msra.mxu0 %v856
        %862 = vmatprep.subr.bf16.mxu0 0
        %863 = vmatpush1.bf16.msra.mxu0 %v855
        %864 = vmatprep.subr.bf16.mxu0 0
        %865 = vmatpush1.bf16.msra.mxu0 %v854
        %866 = vmatprep.subr.bf16.mxu0 0
        %867 = vmatpush1.bf16.msra.mxu0 %v853
        %868 = vmatprep.subr.bf16.mxu0 0
        %869 = vmatpush1.bf16.msra.mxu0 %v852
        %870 = vmatprep.subr.bf16.mxu0 0
        %871 = vmatpush1.bf16.msra.mxu0 %v851
        %872 = vmatprep.subr.bf16.mxu0 0
        %873 = vmatpush1.bf16.msra.mxu0 %v850
        %874 = vmatprep.subr.bf16.mxu0 0
        %875 = vmatpush2.bf16.msra.mxu0 0
        %876 = vmatprep.subr.bf16.mxu0 0
        %877 = vmatpush2.bf16.msra.mxu0 0
        %878 = vmatprep.subr.bf16.mxu0 0
        %879 = vmatpush2.bf16.msra.mxu0 0
        %880 = vmatprep.subr.bf16.mxu0 0
        %881 = vmatpush2.bf16.msra.mxu0 0
        %882 = vmatprep.subr.bf16.mxu0 0
        %883 = vmatpush2.bf16.msra.mxu0 0
        %884 = vmatprep.subr.bf16.mxu0 0
        %885 = vmatpush2.bf16.msra.mxu0 0
        %886 = vmatprep.subr.bf16.mxu0 0
        %887 = vmatpush2.bf16.msra.mxu0 0
        %888 = vmatprep.subr.bf16.mxu0 0
        %889 = vmatpush2.bf16.msra.mxu0 0
        %890 = vmatprep.mubr.bf16.mxu0 0
        %891 = vmatmul.mubr.bf16.gmra.mxu0 %v849
        %v892 = vpop.f32.mrf.mxu0
        %v893 = vadd.f32 0.0, %v892
        %v894 = vpop.f32.mrf.mxu0
        %v895 = vpop.f32.mrf.mxu0
        %v896 = vpop.f32.mrf.mxu0
        %897 = vdwg.mxu0
        %v898 = vadd.f32 %v831, %v893
        %v899 = vld [vmem:[%s403] sm:$0xff]
        %v900 = vld [vmem:[#allocation5] sm:$0xff]
        %v901 = vld [vmem:[#allocation5 + $0x8] sm:$0xff]
        %v902 = vld [vmem:[#allocation5 + $0x10] sm:$0xff]
        %v903 = vld [vmem:[#allocation5 + $0x18] sm:$0xff]
        %v904 = vld [vmem:[#allocation5 + $0x20] sm:$0xff]
        %v905 = vld [vmem:[#allocation5 + $0x28] sm:$0xff]
        %v906 = vld [vmem:[#allocation5 + $0x30] sm:$0xff]
        %v907 = vld [vmem:[#allocation5 + $0x38] sm:$0xff]
        %v908 = vld [vmem:[#allocation5 + $0x40] sm:$0xff]
        %v909 = vld [vmem:[#allocation5 + $0x48] sm:$0xff]
        %v910 = vld [vmem:[#allocation5 + $0x50] sm:$0xff]
        %v911 = vld [vmem:[#allocation5 + $0x58] sm:$0xff]
        %v912 = vld [vmem:[#allocation5 + $0x60] sm:$0xff]
        %v913 = vld [vmem:[#allocation5 + $0x68] sm:$0xff]
        %v914 = vld [vmem:[#allocation5 + $0x70] sm:$0xff]
        %v915 = vld [vmem:[#allocation5 + $0x78] sm:$0xff]
        %v916 = vpack.c.bf16 %v899, %v899
        %v917 = vpack.c.bf16 %v901, %v900
        %v918 = vpack.c.bf16 %v903, %v902
        %v919 = vpack.c.bf16 %v905, %v904
        %v920 = vpack.c.bf16 %v907, %v906
        %v921 = vpack.c.bf16 %v909, %v908
        %v922 = vpack.c.bf16 %v911, %v910
        %v923 = vpack.c.bf16 %v913, %v912
        %v924 = vpack.c.bf16 %v915, %v914
        %925 = vmatprep.subr.bf16.mxu0 0
        %926 = vmatpush1.bf16.msra.mxu0 %v924
        %927 = vmatprep.subr.bf16.mxu0 0
        %928 = vmatpush1.bf16.msra.mxu0 %v923
        %929 = vmatprep.subr.bf16.mxu0 0
        %930 = vmatpush1.bf16.msra.mxu0 %v922
        %931 = vmatprep.subr.bf16.mxu0 0
        %932 = vmatpush1.bf16.msra.mxu0 %v921
        %933 = vmatprep.subr.bf16.mxu0 0
        %934 = vmatpush1.bf16.msra.mxu0 %v920
        %935 = vmatprep.subr.bf16.mxu0 0
        %936 = vmatpush1.bf16.msra.mxu0 %v919
        %937 = vmatprep.subr.bf16.mxu0 0
        %938 = vmatpush1.bf16.msra.mxu0 %v918
        %939 = vmatprep.subr.bf16.mxu0 0
        %940 = vmatpush1.bf16.msra.mxu0 %v917
        %941 = vmatprep.subr.bf16.mxu0 0
        %942 = vmatpush2.bf16.msra.mxu0 0
        %943 = vmatprep.subr.bf16.mxu0 0
        %944 = vmatpush2.bf16.msra.mxu0 0
        %945 = vmatprep.subr.bf16.mxu0 0
        %946 = vmatpush2.bf16.msra.mxu0 0
        %947 = vmatprep.subr.bf16.mxu0 0
        %948 = vmatpush2.bf16.msra.mxu0 0
        %949 = vmatprep.subr.bf16.mxu0 0
        %950 = vmatpush2.bf16.msra.mxu0 0
        %951 = vmatprep.subr.bf16.mxu0 0
        %952 = vmatpush2.bf16.msra.mxu0 0
        %953 = vmatprep.subr.bf16.mxu0 0
        %954 = vmatpush2.bf16.msra.mxu0 0
        %955 = vmatprep.subr.bf16.mxu0 0
        %956 = vmatpush2.bf16.msra.mxu0 0
        %957 = vmatprep.mubr.bf16.mxu0 0
        %958 = vmatmul.mubr.bf16.gmra.mxu0 %v916
        %v959 = vpop.f32.mrf.mxu0
        %v960 = vadd.f32 0.0, %v959
        %v961 = vpop.f32.mrf.mxu0
        %v962 = vpop.f32.mrf.mxu0
        %v963 = vpop.f32.mrf.mxu0
        %964 = vdwg.mxu0
        %v965 = vadd.f32 %v898, %v960
        %v966 = vld [vmem:[%s5] sm:$0x1]
        %v968 = vlaneseq
        %v969 = vshrl.u32 %v968, 7
        %v970 = vsub.s32 0, %v969
        %v971 = vrot.slane %v966, %v970
        %v973 = vadd.f32 %v965, %v971
        %v974 = vmax.f32 %v973, 0.0
        %975 = vmatprep.subr.bf16.mxu0 0
        %976 = vmatpush1.bf16.msra.mxu0 %v924
        %977 = vmatprep.subr.bf16.mxu0 0
        %978 = vmatpush1.bf16.msra.mxu0 %v923
        %979 = vmatprep.subr.bf16.mxu0 0
        %980 = vmatpush1.bf16.msra.mxu0 %v922
        %981 = vmatprep.subr.bf16.mxu0 0
        %982 = vmatpush1.bf16.msra.mxu0 %v921
        %983 = vmatprep.subr.bf16.mxu0 0
        %984 = vmatpush1.bf16.msra.mxu0 %v920
        %985 = vmatprep.subr.bf16.mxu0 0
        %986 = vmatpush1.bf16.msra.mxu0 %v919
        %987 = vmatprep.subr.bf16.mxu0 0
        %988 = vmatpush1.bf16.msra.mxu0 %v918
        %989 = vmatprep.subr.bf16.mxu0 0
        %990 = vmatpush1.bf16.msra.mxu0 %v917
        %991 = vmatprep.subr.bf16.mxu0 0
        %992 = vmatpush2.bf16.msra.mxu0 0
        %993 = vmatprep.subr.bf16.mxu0 0
        %994 = vmatpush2.bf16.msra.mxu0 0
        %995 = vmatprep.subr.bf16.mxu0 0
        %996 = vmatpush2.bf16.msra.mxu0 0
        %997 = vmatprep.subr.bf16.mxu0 0
        %998 = vmatpush2.bf16.msra.mxu0 0
        %999 = vmatprep.subr.bf16.mxu0 0
        %1000 = vmatpush2.bf16.msra.mxu0 0
        %1001 = vmatprep.subr.bf16.mxu0 0
        %1002 = vmatpush2.bf16.msra.mxu0 0
        %1003 = vmatprep.subr.bf16.mxu0 0
        %1004 = vmatpush2.bf16.msra.mxu0 0
        %1005 = vmatprep.subr.bf16.mxu0 0
        %1006 = vmatpush2.bf16.msra.mxu0 0
        %1007 = vmatprep.mubr.bf16.mxu0 0
        %1008 = vmatmul.mubr.bf16.gmra.mxu0 %v407
        %v1009 = vpop.f32.mrf.mxu0
        %v1010 = vadd.f32 %v971, %v1009
        %v1011 = vpop.f32.mrf.mxu0
        %v1012 = vpop.f32.mrf.mxu0
        %v1013 = vpop.f32.mrf.mxu0
        %1014 = vdwg.mxu0
        %v1015 = vmax.f32 %v1010, 0.0
        %v1016 = vpack.c.bf16 %v1015, %v1015
        %v1018 = vsel %vm477, %v1016, 0
        %1020 = vmatprep.subr.bf16.mxu0 0
        %1021 = vmatpush1.bf16.msra.mxu0 0
        %1022 = vmatprep.subr.bf16.mxu0 0
        %1023 = vmatpush1.bf16.msra.mxu0 0
        %1024 = vmatprep.subr.bf16.mxu0 0
        %1025 = vmatpush1.bf16.msra.mxu0 0
        %1026 = vmatprep.subr.bf16.mxu0 0
        %1027 = vmatpush1.bf16.msra.mxu0 0
        %1028 = vmatprep.subr.bf16.mxu0 0
        %1029 = vmatpush1.bf16.msra.mxu0 0
        %1030 = vmatprep.subr.bf16.mxu0 0
        %1031 = vmatpush1.bf16.msra.mxu0 0
        %1032 = vmatprep.subr.bf16.mxu0 0
        %1033 = vmatpush1.bf16.msra.mxu0 0
        %1034 = vmatprep.subr.bf16.mxu0 0
        %1035 = vmatpush1.bf16.msra.mxu0 %v1018
        %1036 = vmatprep.subr.bf16.mxu0 0
        %1037 = vmatpush2.bf16.msra.mxu0 0
        %1038 = vmatprep.subr.bf16.mxu0 0
        %1039 = vmatpush2.bf16.msra.mxu0 0
        %1040 = vmatprep.subr.bf16.mxu0 0
        %1041 = vmatpush2.bf16.msra.mxu0 0
        %1042 = vmatprep.subr.bf16.mxu0 0
        %1043 = vmatpush2.bf16.msra.mxu0 0
        %1044 = vmatprep.subr.bf16.mxu0 0
        %1045 = vmatpush2.bf16.msra.mxu0 0
        %1046 = vmatprep.subr.bf16.mxu0 0
        %1047 = vmatpush2.bf16.msra.mxu0 0
        %1048 = vmatprep.subr.bf16.mxu0 0
        %1049 = vmatpush2.bf16.msra.mxu0 0
        %1050 = vmatprep.subr.bf16.mxu0 0
        %1051 = vmatpush2.bf16.msra.mxu0 0
        %1052 = vmatprep.mubr.bf16.mxu0 0
        %1053 = vmatmul.mubr.bf16.gmra.mxu0 %v469
        %v1054 = vpop.f32.mrf.mxu0
        %v1055 = vadd.f32 0.0, %v1054
        %v1056 = vpop.f32.mrf.mxu0
        %v1057 = vpop.f32.mrf.mxu0
        %v1058 = vadd.f32 0.0, %v1057
        %v1059 = vpop.f32.mrf.mxu0
        %1060 = vmatprep.mubr.bf16.mxu0 0
        %1061 = vmatmul.mubr.bf16.gmra.mxu0 %v472
        %v1062 = vpop.f32.mrf.mxu0
        %v1063 = vadd.f32 0.0, %v1062
        %v1064 = vpop.f32.mrf.mxu0
        %v1065 = vpop.f32.mrf.mxu0
        %v1066 = vadd.f32 0.0, %v1065
        %v1067 = vpop.f32.mrf.mxu0
        %1068 = vmatprep.mubr.bf16.mxu0 0
        %1069 = vmatmul.mubr.bf16.gmra.mxu0 %v475
        %v1070 = vpop.f32.mrf.mxu0
        %v1071 = vadd.f32 0.0, %v1070
        %v1072 = vpop.f32.mrf.mxu0
        %v1073 = vpop.f32.mrf.mxu0
        %v1074 = vpop.f32.mrf.mxu0
        %1075 = vdwg.mxu0
        %v1076 = vmul.f32 %v1055, %v540
        %v1077 = vmul.f32 %v1058, %v545
        %v1078 = vmul.f32 %v1063, %v550
        %v1079 = vmul.f32 %v1066, %v555
        %v1080 = vmul.f32 %v1071, %v560
        %v1081 = vld [vmem:[#allocation7] sm:$0xff]
        %v1082 = vld [vmem:[#allocation7 + $0x8] sm:$0xff]
        %v1083 = vld [vmem:[#allocation7 + $0x10] sm:$0xff]
        %v1084 = vld [vmem:[#allocation7 + $0x18] sm:$0xff]
        %v1085 = vld [vmem:[#allocation7 + $0x20] sm:$0xff]
        %v1086 = vld [vmem:[#allocation7 + $0x28] sm:$0xff]
        %v1087 = vld [vmem:[#allocation7 + $0x30] sm:$0xff]
        %v1088 = vld [vmem:[#allocation7 + $0x38] sm:$0xff]
        %v1089 = vld [vmem:[#allocation7 + $0x40] sm:$0xff]
        %v1090 = vld [vmem:[#allocation7 + $0x48] sm:$0xff]
        %v1091 = vld [vmem:[#allocation7 + $0x50] sm:$0xff]
        %v1092 = vld [vmem:[#allocation7 + $0x58] sm:$0xff]
        %v1093 = vld [vmem:[#allocation7 + $0x60] sm:$0xff]
        %v1094 = vld [vmem:[#allocation7 + $0x68] sm:$0xff]
        %v1095 = vld [vmem:[#allocation7 + $0x70] sm:$0xff]
        %v1096 = vld [vmem:[#allocation7 + $0x78] sm:$0xff]
        %v1097 = vpack.c.bf16 %v1076, %v1076
        %v1098 = vpack.c.bf16 %v1082, %v1081
        %v1099 = vpack.c.bf16 %v1084, %v1083
        %v1100 = vpack.c.bf16 %v1086, %v1085
        %v1101 = vpack.c.bf16 %v1088, %v1087
        %v1102 = vpack.c.bf16 %v1090, %v1089
        %v1103 = vpack.c.bf16 %v1092, %v1091
        %v1104 = vpack.c.bf16 %v1094, %v1093
        %v1105 = vpack.c.bf16 %v1096, %v1095
        %s1106 = scalar_lea.vmem [#allocation7], 128
        %v1107 = vld [vmem:[%s1106] sm:$0xff]
        %v1108 = vld [vmem:[%s1106 + $0x8] sm:$0xff]
        %v1109 = vld [vmem:[%s1106 + $0x10] sm:$0xff]
        %v1110 = vld [vmem:[%s1106 + $0x18] sm:$0xff]
        %v1111 = vld [vmem:[%s1106 + $0x20] sm:$0xff]
        %v1112 = vld [vmem:[%s1106 + $0x28] sm:$0xff]
        %v1113 = vld [vmem:[%s1106 + $0x30] sm:$0xff]
        %v1114 = vld [vmem:[%s1106 + $0x38] sm:$0xff]
        %v1115 = vld [vmem:[%s1106 + $0x40] sm:$0xff]
        %v1116 = vld [vmem:[%s1106 + $0x48] sm:$0xff]
        %v1117 = vld [vmem:[%s1106 + $0x50] sm:$0xff]
        %v1118 = vld [vmem:[%s1106 + $0x58] sm:$0xff]
        %v1119 = vld [vmem:[%s1106 + $0x60] sm:$0xff]
        %v1120 = vld [vmem:[%s1106 + $0x68] sm:$0xff]
        %v1121 = vld [vmem:[%s1106 + $0x70] sm:$0xff]
        %v1122 = vld [vmem:[%s1106 + $0x78] sm:$0xff]
        %v1123 = vpack.c.bf16 %v1077, %v1077
        %v1124 = vpack.c.bf16 %v1108, %v1107
        %v1125 = vpack.c.bf16 %v1110, %v1109
        %v1126 = vpack.c.bf16 %v1112, %v1111
        %v1127 = vpack.c.bf16 %v1114, %v1113
        %v1128 = vpack.c.bf16 %v1116, %v1115
        %v1129 = vpack.c.bf16 %v1118, %v1117
        %v1130 = vpack.c.bf16 %v1120, %v1119
        %v1131 = vpack.c.bf16 %v1122, %v1121
        %1132 = vmatprep.subr.bf16.mxu0 0
        %1133 = vmatpush1.bf16.msra.mxu0 %v1131
        %1134 = vmatprep.subr.bf16.mxu0 0
        %1135 = vmatpush1.bf16.msra.mxu0 %v1130
        %1136 = vmatprep.subr.bf16.mxu0 0
        %1137 = vmatpush1.bf16.msra.mxu0 %v1129
        %1138 = vmatprep.subr.bf16.mxu0 0
        %1139 = vmatpush1.bf16.msra.mxu0 %v1128
        %1140 = vmatprep.subr.bf16.mxu0 0
        %1141 = vmatpush1.bf16.msra.mxu0 %v1127
        %1142 = vmatprep.subr.bf16.mxu0 0
        %1143 = vmatpush1.bf16.msra.mxu0 %v1126
        %1144 = vmatprep.subr.bf16.mxu0 0
        %1145 = vmatpush1.bf16.msra.mxu0 %v1125
        %1146 = vmatprep.subr.bf16.mxu0 0
        %1147 = vmatpush1.bf16.msra.mxu0 %v1124
        %1148 = vmatprep.subr.bf16.mxu0 0
        %1149 = vmatpush2.bf16.msra.mxu0 0
        %1150 = vmatprep.subr.bf16.mxu0 0
        %1151 = vmatpush2.bf16.msra.mxu0 0
        %1152 = vmatprep.subr.bf16.mxu0 0
        %1153 = vmatpush2.bf16.msra.mxu0 0
        %1154 = vmatprep.subr.bf16.mxu0 0
        %1155 = vmatpush2.bf16.msra.mxu0 0
        %1156 = vmatprep.subr.bf16.mxu0 0
        %1157 = vmatpush2.bf16.msra.mxu0 0
        %1158 = vmatprep.subr.bf16.mxu0 0
        %1159 = vmatpush2.bf16.msra.mxu0 0
        %1160 = vmatprep.subr.bf16.mxu0 0
        %1161 = vmatpush2.bf16.msra.mxu0 0
        %1162 = vmatprep.subr.bf16.mxu0 0
        %1163 = vmatpush2.bf16.msra.mxu0 0
        %1164 = vmatprep.mubr.bf16.mxu0 0
        %1165 = vmatmul.mubr.bf16.gmra.mxu0 %v1123
        %v1166 = vpop.f32.mrf.mxu0
        %v1167 = vadd.f32 0.0, %v1166
        %v1168 = vpop.f32.mrf.mxu0
        %v1169 = vpop.f32.mrf.mxu0
        %v1170 = vpop.f32.mrf.mxu0
        %1171 = vdwg.mxu0
        %1172 = vmatprep.subr.bf16.mxu0 0
        %1173 = vmatpush1.bf16.msra.mxu0 %v1105
        %1174 = vmatprep.subr.bf16.mxu0 0
        %1175 = vmatpush1.bf16.msra.mxu0 %v1104
        %1176 = vmatprep.subr.bf16.mxu0 0
        %1177 = vmatpush1.bf16.msra.mxu0 %v1103
        %1178 = vmatprep.subr.bf16.mxu0 0
        %1179 = vmatpush1.bf16.msra.mxu0 %v1102
        %1180 = vmatprep.subr.bf16.mxu0 0
        %1181 = vmatpush1.bf16.msra.mxu0 %v1101
        %1182 = vmatprep.subr.bf16.mxu0 0
        %1183 = vmatpush1.bf16.msra.mxu0 %v1100
        %1184 = vmatprep.subr.bf16.mxu0 0
        %1185 = vmatpush1.bf16.msra.mxu0 %v1099
        %1186 = vmatprep.subr.bf16.mxu0 0
        %1187 = vmatpush1.bf16.msra.mxu0 %v1098
        %1188 = vmatprep.subr.bf16.mxu0 0
        %1189 = vmatpush2.bf16.msra.mxu0 0
        %1190 = vmatprep.subr.bf16.mxu0 0
        %1191 = vmatpush2.bf16.msra.mxu0 0
        %1192 = vmatprep.subr.bf16.mxu0 0
        %1193 = vmatpush2.bf16.msra.mxu0 0
        %1194 = vmatprep.subr.bf16.mxu0 0
        %1195 = vmatpush2.bf16.msra.mxu0 0
        %1196 = vmatprep.subr.bf16.mxu0 0
        %1197 = vmatpush2.bf16.msra.mxu0 0
        %1198 = vmatprep.subr.bf16.mxu0 0
        %1199 = vmatpush2.bf16.msra.mxu0 0
        %1200 = vmatprep.subr.bf16.mxu0 0
        %1201 = vmatpush2.bf16.msra.mxu0 0
        %1202 = vmatprep.subr.bf16.mxu0 0
        %1203 = vmatpush2.bf16.msra.mxu0 0
        %1204 = vmatprep.mubr.bf16.mxu0 0
        %1205 = vmatmul.mubr.bf16.gmra.mxu0 %v1097
        %v1206 = vpop.f32.mrf.mxu0
        %v1207 = vadd.f32 %v1167, %v1206
        %v1208 = vpop.f32.mrf.mxu0
        %v1209 = vpop.f32.mrf.mxu0
        %v1210 = vpop.f32.mrf.mxu0
        %1211 = vdwg.mxu0
        %s1212 = scalar_lea.vmem [#allocation7], 256
        %v1213 = vld [vmem:[%s1212] sm:$0xff]
        %v1214 = vld [vmem:[%s1212 + $0x8] sm:$0xff]
        %v1215 = vld [vmem:[%s1212 + $0x10] sm:$0xff]
        %v1216 = vld [vmem:[%s1212 + $0x18] sm:$0xff]
        %v1217 = vld [vmem:[%s1212 + $0x20] sm:$0xff]
        %v1218 = vld [vmem:[%s1212 + $0x28] sm:$0xff]
        %v1219 = vld [vmem:[%s1212 + $0x30] sm:$0xff]
        %v1220 = vld [vmem:[%s1212 + $0x38] sm:$0xff]
        %v1221 = vld [vmem:[%s1212 + $0x40] sm:$0xff]
        %v1222 = vld [vmem:[%s1212 + $0x48] sm:$0xff]
        %v1223 = vld [vmem:[%s1212 + $0x50] sm:$0xff]
        %v1224 = vld [vmem:[%s1212 + $0x58] sm:$0xff]
        %v1225 = vld [vmem:[%s1212 + $0x60] sm:$0xff]
        %v1226 = vld [vmem:[%s1212 + $0x68] sm:$0xff]
        %v1227 = vld [vmem:[%s1212 + $0x70] sm:$0xff]
        %v1228 = vld [vmem:[%s1212 + $0x78] sm:$0xff]
        %v1229 = vpack.c.bf16 %v1078, %v1078
        %v1230 = vpack.c.bf16 %v1214, %v1213
        %v1231 = vpack.c.bf16 %v1216, %v1215
        %v1232 = vpack.c.bf16 %v1218, %v1217
        %v1233 = vpack.c.bf16 %v1220, %v1219
        %v1234 = vpack.c.bf16 %v1222, %v1221
        %v1235 = vpack.c.bf16 %v1224, %v1223
        %v1236 = vpack.c.bf16 %v1226, %v1225
        %v1237 = vpack.c.bf16 %v1228, %v1227
        %1238 = vmatprep.subr.bf16.mxu0 0
        %1239 = vmatpush1.bf16.msra.mxu0 %v1237
        %1240 = vmatprep.subr.bf16.mxu0 0
        %1241 = vmatpush1.bf16.msra.mxu0 %v1236
        %1242 = vmatprep.subr.bf16.mxu0 0
        %1243 = vmatpush1.bf16.msra.mxu0 %v1235
        %1244 = vmatprep.subr.bf16.mxu0 0
        %1245 = vmatpush1.bf16.msra.mxu0 %v1234
        %1246 = vmatprep.subr.bf16.mxu0 0
        %1247 = vmatpush1.bf16.msra.mxu0 %v1233
        %1248 = vmatprep.subr.bf16.mxu0 0
        %1249 = vmatpush1.bf16.msra.mxu0 %v1232
        %1250 = vmatprep.subr.bf16.mxu0 0
        %1251 = vmatpush1.bf16.msra.mxu0 %v1231
        %1252 = vmatprep.subr.bf16.mxu0 0
        %1253 = vmatpush1.bf16.msra.mxu0 %v1230
        %1254 = vmatprep.subr.bf16.mxu0 0
        %1255 = vmatpush2.bf16.msra.mxu0 0
        %1256 = vmatprep.subr.bf16.mxu0 0
        %1257 = vmatpush2.bf16.msra.mxu0 0
        %1258 = vmatprep.subr.bf16.mxu0 0
        %1259 = vmatpush2.bf16.msra.mxu0 0
        %1260 = vmatprep.subr.bf16.mxu0 0
        %1261 = vmatpush2.bf16.msra.mxu0 0
        %1262 = vmatprep.subr.bf16.mxu0 0
        %1263 = vmatpush2.bf16.msra.mxu0 0
        %1264 = vmatprep.subr.bf16.mxu0 0
        %1265 = vmatpush2.bf16.msra.mxu0 0
        %1266 = vmatprep.subr.bf16.mxu0 0
        %1267 = vmatpush2.bf16.msra.mxu0 0
        %1268 = vmatprep.subr.bf16.mxu0 0
        %1269 = vmatpush2.bf16.msra.mxu0 0
        %1270 = vmatprep.mubr.bf16.mxu0 0
        %1271 = vmatmul.mubr.bf16.gmra.mxu0 %v1229
        %v1272 = vpop.f32.mrf.mxu0
        %v1273 = vadd.f32 0.0, %v1272
        %v1274 = vpop.f32.mrf.mxu0
        %v1275 = vpop.f32.mrf.mxu0
        %v1276 = vpop.f32.mrf.mxu0
        %1277 = vdwg.mxu0
        %v1278 = vadd.f32 %v1207, %v1273
        %s1279 = scalar_lea.vmem [#allocation7], 384
        %v1280 = vld [vmem:[%s1279] sm:$0xff]
        %v1281 = vld [vmem:[%s1279 + $0x8] sm:$0xff]
        %v1282 = vld [vmem:[%s1279 + $0x10] sm:$0xff]
        %v1283 = vld [vmem:[%s1279 + $0x18] sm:$0xff]
        %v1284 = vld [vmem:[%s1279 + $0x20] sm:$0xff]
        %v1285 = vld [vmem:[%s1279 + $0x28] sm:$0xff]
        %v1286 = vld [vmem:[%s1279 + $0x30] sm:$0xff]
        %v1287 = vld [vmem:[%s1279 + $0x38] sm:$0xff]
        %v1288 = vld [vmem:[%s1279 + $0x40] sm:$0xff]
        %v1289 = vld [vmem:[%s1279 + $0x48] sm:$0xff]
        %v1290 = vld [vmem:[%s1279 + $0x50] sm:$0xff]
        %v1291 = vld [vmem:[%s1279 + $0x58] sm:$0xff]
        %v1292 = vld [vmem:[%s1279 + $0x60] sm:$0xff]
        %v1293 = vld [vmem:[%s1279 + $0x68] sm:$0xff]
        %v1294 = vld [vmem:[%s1279 + $0x70] sm:$0xff]
        %v1295 = vld [vmem:[%s1279 + $0x78] sm:$0xff]
        %v1296 = vpack.c.bf16 %v1079, %v1079
        %v1297 = vpack.c.bf16 %v1281, %v1280
        %v1298 = vpack.c.bf16 %v1283, %v1282
        %v1299 = vpack.c.bf16 %v1285, %v1284
        %v1300 = vpack.c.bf16 %v1287, %v1286
        %v1301 = vpack.c.bf16 %v1289, %v1288
        %v1302 = vpack.c.bf16 %v1291, %v1290
        %v1303 = vpack.c.bf16 %v1293, %v1292
        %v1304 = vpack.c.bf16 %v1295, %v1294
        %1305 = vmatprep.subr.bf16.mxu0 0
        %1306 = vmatpush1.bf16.msra.mxu0 %v1304
        %1307 = vmatprep.subr.bf16.mxu0 0
        %1308 = vmatpush1.bf16.msra.mxu0 %v1303
        %1309 = vmatprep.subr.bf16.mxu0 0
        %1310 = vmatpush1.bf16.msra.mxu0 %v1302
        %1311 = vmatprep.subr.bf16.mxu0 0
        %1312 = vmatpush1.bf16.msra.mxu0 %v1301
        %1313 = vmatprep.subr.bf16.mxu0 0
        %1314 = vmatpush1.bf16.msra.mxu0 %v1300
        %1315 = vmatprep.subr.bf16.mxu0 0
        %1316 = vmatpush1.bf16.msra.mxu0 %v1299
        %1317 = vmatprep.subr.bf16.mxu0 0
        %1318 = vmatpush1.bf16.msra.mxu0 %v1298
        %1319 = vmatprep.subr.bf16.mxu0 0
        %1320 = vmatpush1.bf16.msra.mxu0 %v1297
        %1321 = vmatprep.subr.bf16.mxu0 0
        %1322 = vmatpush2.bf16.msra.mxu0 0
        %1323 = vmatprep.subr.bf16.mxu0 0
        %1324 = vmatpush2.bf16.msra.mxu0 0
        %1325 = vmatprep.subr.bf16.mxu0 0
        %1326 = vmatpush2.bf16.msra.mxu0 0
        %1327 = vmatprep.subr.bf16.mxu0 0
        %1328 = vmatpush2.bf16.msra.mxu0 0
        %1329 = vmatprep.subr.bf16.mxu0 0
        %1330 = vmatpush2.bf16.msra.mxu0 0
        %1331 = vmatprep.subr.bf16.mxu0 0
        %1332 = vmatpush2.bf16.msra.mxu0 0
        %1333 = vmatprep.subr.bf16.mxu0 0
        %1334 = vmatpush2.bf16.msra.mxu0 0
        %1335 = vmatprep.subr.bf16.mxu0 0
        %1336 = vmatpush2.bf16.msra.mxu0 0
        %1337 = vmatprep.mubr.bf16.mxu0 0
        %1338 = vmatmul.mubr.bf16.gmra.mxu0 %v1296
        %v1339 = vpop.f32.mrf.mxu0
        %v1340 = vadd.f32 0.0, %v1339
        %v1341 = vpop.f32.mrf.mxu0
        %v1342 = vpop.f32.mrf.mxu0
        %v1343 = vpop.f32.mrf.mxu0
        %1344 = vdwg.mxu0
        %v1345 = vadd.f32 %v1278, %v1340
        %s1346 = scalar_lea.vmem [#allocation7], 512
        %v1347 = vld [vmem:[%s1346] sm:$0xff]
        %v1348 = vld [vmem:[%s1346 + $0x8] sm:$0xff]
        %v1349 = vld [vmem:[%s1346 + $0x10] sm:$0xff]
        %v1350 = vld [vmem:[%s1346 + $0x18] sm:$0xff]
        %v1351 = vld [vmem:[%s1346 + $0x20] sm:$0xff]
        %v1352 = vld [vmem:[%s1346 + $0x28] sm:$0xff]
        %v1353 = vld [vmem:[%s1346 + $0x30] sm:$0xff]
        %v1354 = vld [vmem:[%s1346 + $0x38] sm:$0xff]
        %v1355 = vld [vmem:[%s1346 + $0x40] sm:$0xff]
        %v1356 = vld [vmem:[%s1346 + $0x48] sm:$0xff]
        %v1357 = vld [vmem:[%s1346 + $0x50] sm:$0xff]
        %v1358 = vld [vmem:[%s1346 + $0x58] sm:$0xff]
        %v1359 = vld [vmem:[%s1346 + $0x60] sm:$0xff]
        %v1360 = vld [vmem:[%s1346 + $0x68] sm:$0xff]
        %v1361 = vld [vmem:[%s1346 + $0x70] sm:$0xff]
        %v1362 = vld [vmem:[%s1346 + $0x78] sm:$0xff]
        %v1363 = vpack.c.bf16 %v1080, %v1080
        %v1364 = vpack.c.bf16 %v1348, %v1347
        %v1365 = vpack.c.bf16 %v1350, %v1349
        %v1366 = vpack.c.bf16 %v1352, %v1351
        %v1367 = vpack.c.bf16 %v1354, %v1353
        %v1368 = vpack.c.bf16 %v1356, %v1355
        %v1369 = vpack.c.bf16 %v1358, %v1357
        %v1370 = vpack.c.bf16 %v1360, %v1359
        %v1371 = vpack.c.bf16 %v1362, %v1361
        %1372 = vmatprep.subr.bf16.mxu0 0
        %1373 = vmatpush1.bf16.msra.mxu0 %v1371
        %1374 = vmatprep.subr.bf16.mxu0 0
        %1375 = vmatpush1.bf16.msra.mxu0 %v1370
        %1376 = vmatprep.subr.bf16.mxu0 0
        %1377 = vmatpush1.bf16.msra.mxu0 %v1369
        %1378 = vmatprep.subr.bf16.mxu0 0
        %1379 = vmatpush1.bf16.msra.mxu0 %v1368
        %1380 = vmatprep.subr.bf16.mxu0 0
        %1381 = vmatpush1.bf16.msra.mxu0 %v1367
        %1382 = vmatprep.subr.bf16.mxu0 0
        %1383 = vmatpush1.bf16.msra.mxu0 %v1366
        %1384 = vmatprep.subr.bf16.mxu0 0
        %1385 = vmatpush1.bf16.msra.mxu0 %v1365
        %1386 = vmatprep.subr.bf16.mxu0 0
        %1387 = vmatpush1.bf16.msra.mxu0 %v1364
        %1388 = vmatprep.subr.bf16.mxu0 0
        %1389 = vmatpush2.bf16.msra.mxu0 0
        %1390 = vmatprep.subr.bf16.mxu0 0
        %1391 = vmatpush2.bf16.msra.mxu0 0
        %1392 = vmatprep.subr.bf16.mxu0 0
        %1393 = vmatpush2.bf16.msra.mxu0 0
        %1394 = vmatprep.subr.bf16.mxu0 0
        %1395 = vmatpush2.bf16.msra.mxu0 0
        %1396 = vmatprep.subr.bf16.mxu0 0
        %1397 = vmatpush2.bf16.msra.mxu0 0
        %1398 = vmatprep.subr.bf16.mxu0 0
        %1399 = vmatpush2.bf16.msra.mxu0 0
        %1400 = vmatprep.subr.bf16.mxu0 0
        %1401 = vmatpush2.bf16.msra.mxu0 0
        %1402 = vmatprep.subr.bf16.mxu0 0
        %1403 = vmatpush2.bf16.msra.mxu0 0
        %1404 = vmatprep.mubr.bf16.mxu0 0
        %1405 = vmatmul.mubr.bf16.gmra.mxu0 %v1363
        %v1406 = vpop.f32.mrf.mxu0
        %v1407 = vadd.f32 0.0, %v1406
        %v1408 = vpop.f32.mrf.mxu0
        %v1409 = vpop.f32.mrf.mxu0
        %v1410 = vpop.f32.mrf.mxu0
        %1411 = vdwg.mxu0
        %v1412 = vadd.f32 %v1345, %v1407
        %v1413 = vld [vmem:[#allocation8] sm:$0xff]
        %v1414 = vld [vmem:[#allocation8 + $0x8] sm:$0xff]
        %v1415 = vld [vmem:[#allocation8 + $0x10] sm:$0xff]
        %v1416 = vld [vmem:[#allocation8 + $0x18] sm:$0xff]
        %v1417 = vld [vmem:[#allocation8 + $0x20] sm:$0xff]
        %v1418 = vld [vmem:[#allocation8 + $0x28] sm:$0xff]
        %v1419 = vld [vmem:[#allocation8 + $0x30] sm:$0xff]
        %v1420 = vld [vmem:[#allocation8 + $0x38] sm:$0xff]
        %v1421 = vld [vmem:[#allocation8 + $0x40] sm:$0xff]
        %v1422 = vld [vmem:[#allocation8 + $0x48] sm:$0xff]
        %v1423 = vld [vmem:[#allocation8 + $0x50] sm:$0xff]
        %v1424 = vld [vmem:[#allocation8 + $0x58] sm:$0xff]
        %v1425 = vld [vmem:[#allocation8 + $0x60] sm:$0xff]
        %v1426 = vld [vmem:[#allocation8 + $0x68] sm:$0xff]
        %v1427 = vld [vmem:[#allocation8 + $0x70] sm:$0xff]
        %v1428 = vld [vmem:[#allocation8 + $0x78] sm:$0xff]
        %v1429 = vpack.c.bf16 %v974, %v974
        %v1430 = vpack.c.bf16 %v1414, %v1413
        %v1431 = vpack.c.bf16 %v1416, %v1415
        %v1432 = vpack.c.bf16 %v1418, %v1417
        %v1433 = vpack.c.bf16 %v1420, %v1419
        %v1434 = vpack.c.bf16 %v1422, %v1421
        %v1435 = vpack.c.bf16 %v1424, %v1423
        %v1436 = vpack.c.bf16 %v1426, %v1425
        %v1437 = vpack.c.bf16 %v1428, %v1427
        %1438 = vmatprep.subr.bf16.mxu0 0
        %1439 = vmatpush1.bf16.msra.mxu0 %v1437
        %1440 = vmatprep.subr.bf16.mxu0 0
        %1441 = vmatpush1.bf16.msra.mxu0 %v1436
        %1442 = vmatprep.subr.bf16.mxu0 0
        %1443 = vmatpush1.bf16.msra.mxu0 %v1435
        %1444 = vmatprep.subr.bf16.mxu0 0
        %1445 = vmatpush1.bf16.msra.mxu0 %v1434
        %1446 = vmatprep.subr.bf16.mxu0 0
        %1447 = vmatpush1.bf16.msra.mxu0 %v1433
        %1448 = vmatprep.subr.bf16.mxu0 0
        %1449 = vmatpush1.bf16.msra.mxu0 %v1432
        %1450 = vmatprep.subr.bf16.mxu0 0
        %1451 = vmatpush1.bf16.msra.mxu0 %v1431
        %1452 = vmatprep.subr.bf16.mxu0 0
        %1453 = vmatpush1.bf16.msra.mxu0 %v1430
        %1454 = vmatprep.subr.bf16.mxu0 0
        %1455 = vmatpush2.bf16.msra.mxu0 0
        %1456 = vmatprep.subr.bf16.mxu0 0
        %1457 = vmatpush2.bf16.msra.mxu0 0
        %1458 = vmatprep.subr.bf16.mxu0 0
        %1459 = vmatpush2.bf16.msra.mxu0 0
        %1460 = vmatprep.subr.bf16.mxu0 0
        %1461 = vmatpush2.bf16.msra.mxu0 0
        %1462 = vmatprep.subr.bf16.mxu0 0
        %1463 = vmatpush2.bf16.msra.mxu0 0
        %1464 = vmatprep.subr.bf16.mxu0 0
        %1465 = vmatpush2.bf16.msra.mxu0 0
        %1466 = vmatprep.subr.bf16.mxu0 0
        %1467 = vmatpush2.bf16.msra.mxu0 0
        %1468 = vmatprep.subr.bf16.mxu0 0
        %1469 = vmatpush2.bf16.msra.mxu0 0
        %1470 = vmatprep.mubr.bf16.mxu0 0
        %1471 = vmatmul.mubr.bf16.gmra.mxu0 %v1429
        %v1472 = vpop.f32.mrf.mxu0
        %v1473 = vadd.f32 0.0, %v1472
        %v1474 = vpop.f32.mrf.mxu0
        %v1475 = vpop.f32.mrf.mxu0
        %v1476 = vpop.f32.mrf.mxu0
        %1477 = vdwg.mxu0
        %v1478 = vadd.f32 %v1412, %v1473
        %v1479 = vld [vmem:[%s8] sm:$0x1]
        %v1481 = vlaneseq
        %v1482 = vshrl.u32 %v1481, 7
        %v1483 = vsub.s32 0, %v1482
        %v1484 = vrot.slane %v1479, %v1483
        %v1486 = vadd.f32 %v1478, %v1484
        %1487 = vst [vmem:[%s395] sm:$0xff] %v1486
        %s1488 = sand.u32 %s233, 1
        %s1489 = scalar_lea.sflag [#allocation4], %s1488
        %s1490 = sand.u32 %s233, 1
        %s1491 = smul.addr %s1490, 8
        %s1492 = scalar_lea.vmem [#allocation10], %s1491
        // Predicated region
        $region73: #{tpu_custom_call.1} parent=55 // pred_check
          %p1493 = pneg %p243
        $region74: #{tpu_custom_call.1} parent=55 // pred_check_branch
          %1495 = sbr.rel (%p1493) target = $region76
        $region75: #{tpu_custom_call.1} parent=55 // pred_region
          %s1497 = ssub.s32 128, 128
          %1498 = vsyncadd %s1489, %s1497
          %s1499 = smul.addr %s26, 128
          %s1500 = scalar_lea.hbm %s9, %s1499
          %s1502 = sshll.u32 %s1492, 4
          %s1503 = int_to_ptr.vmem [resolvable:$true] %s1502
          %1505 = dma.vmem_to_hbm [thread:$0]  %s1503, 128, %s1500, %s1489
        $region76: #{tpu_custom_call.1} parent=55 // pred_fallthru
          _
      $region56: #{tpu_custom_call.1} parent=5 // pred_fallthru
        _
      %p1506 = scmp.le.s32.totalorder 2, %s21
      // Predicated region
      $region77: #{tpu_custom_call.1} parent=5 // pred_check
        %p1507 = pneg %p1506
      $region78: #{tpu_custom_call.1} parent=5 // pred_check_branch
        %1509 = sbr.rel (%p1507) target = $region80
      $region79: #{tpu_custom_call.1} parent=5 // pred_region
        %s1510 = ssub.s32 %s21, 2
        // Predicated region
        $region81: #{tpu_custom_call.1} parent=79 // pred_check
          %p1511 = pneg %p249
        $region82: #{tpu_custom_call.1} parent=79 // pred_check_branch
          %1513 = sbr.rel (%p1511) target = $region84
        $region83: #{tpu_custom_call.1} parent=79 // pred_region
          %s1514 = sand.u32 %s234, 1
          %s1515 = scalar_lea.sflag [#allocation4], %s1514
          %s1516 = sand.u32 %s234, 1
          %s1517 = smul.addr %s1516, 8
          %s1518 = scalar_lea.vmem [#allocation10], %s1517
          %1519 = dma.done %s1515, 128
        $region84: #{tpu_custom_call.1} parent=79 // pred_fallthru
          _
      $region80: #{tpu_custom_call.1} parent=5 // pred_fallthru
        _
    $region6: #{tpu_custom_call.1} parent=1 // loop_footer
      %s25 = sadd.s32 1, %s21
    $region7: #{tpu_custom_call.1} parent=1 // loop_footer_branch
      %20 = sbr.rel target = $region3
    $region8: #{tpu_custom_call.1} parent=1 // loop_exit
      _
    %1520 = vsyncpa [#allocation3], 1
    %s1521 = scalar_lea.sflag [#allocation3], 1
    %1522 = vsyncpa %s1521, 1
    %1523 = vsyncpa [#allocation6], 1
    %1524 = vsyncpa [#allocation9], 1
    %1525 = vsyncpa [#allocation4], 1
    %s1526 = scalar_lea.sflag [#allocation4], 1
    %1527 = vsyncpa %s1526, 1

</llo_original>
